<compile_context>
chip_gen: v5e
topology: v5e:2x2
jax: 0.10.0
libtpu: 0.0.40
codegen_flags: <defaults>
</compile_context>

<pallas_src>
from functools import partial

import jax
import jax.numpy as jnp
from jax.experimental import pallas as pl
from jax.experimental.pallas import tpu as pltpu

S = 8            # samples (independent graph batches) per kernel launch
N = 8            # nodes per sample
H = 128          # hiddim (module default)
G = 2            # graphs per sample
NUM_LAYER = 3    # module default 6; kept small for the example
NUM_TASKS = 1

_L = NUM_LAYER
# Row offsets inside the packed bf16 weight-matrix slab [(5+L)*H, H].
_OFF_T0 = 0
_OFF_T1 = H
_OFF_CONV = 2 * H            # + layer * H
_OFF_POOL = (2 + _L) * H
_OFF_P1 = (3 + _L) * H
_OFF_P2 = (4 + _L) * H
_WROWS = (5 + _L) * H
# Row indices inside the f32 bias slab [5+L, H].
_B_T0, _B_T1, _B_CONV = 0, 1, 2                  # conv biases at rows 2 .. 2+L-1
_B_POOL, _B_P1, _B_P2 = 2 + _L, 3 + _L, 4 + _L
_BROWS = 5 + _L


# ---------------------------------------------------------------------------
# One fused kernel body per sample: tupleinit -> NUM_LAYER x NGNNConv(+masked
# residual) -> subgraph mean pool -> poolmlp -> graph sum pool -> pred MLP.
# ---------------------------------------------------------------------------
def _spmodel_kernel(x_ref, axt_ref, misc_ref, wm_ref, b_ref, out_ref):
    f32, bf16 = jnp.float32, jnp.bfloat16

    x = x_ref[0]                                  # [N, H]  node embeddings (f32)
    axt = axt_ref[0]                              # [2N, N, H]
    A = axt[:N]                                   # [N, N, H] masked edge embeddings
    xt = axt[N:]                                  # [N, N, H] masked tuple-feat embeddings
    misc = misc_ref[0]                            # [N + 8, N]
    mask = misc[:N]                               # [N, N]  tuple / subgraph-member mask
    bhot = misc[N:]                               # [8, N]  graph one-hot (rows >= G are 0)

    # -- tupleinit ------------------------------------------------------------
    xb = x.astype(bf16)
    s0 = jnp.dot(xb, wm_ref[_OFF_T0:_OFF_T0 + H],
                 preferred_element_type=f32) + b_ref[_B_T0:_B_T0 + 1]
    s1 = jnp.dot(xb, wm_ref[_OFF_T1:_OFF_T1 + H],
                 preferred_element_type=f32) + b_ref[_B_T1:_B_T1 + 1]
    # X[i, j, :] = lin0(x)[i] * lin1(x)[j] * tuplefeat[i, j]   (0 at masked tuples)
    X3 = (jnp.broadcast_to(s0[:, None, :], (N, N, H))
          * jnp.broadcast_to(s1[None, :, :], (N, N, H)) * xt)

    # Hoisted once (JAX does not CSE broadcast_in_dim inside the layer loop).
    maskH = jnp.broadcast_to(mask[:, :, None], (N, N, H))

    # -- stacked NGNN convolutions ('SS', aggr='sum') with masked residual ----
    # TODO(synk): PyGHO's conv/pool MLP norm+dropout internals unavailable;
    #             Linear+ReLU is used for every MLP.
    for layer in range(NUM_LAYER):                # static unroll
        # Message passing stays on the VPU in f32: m[i, j] = sum_k X[i, k] * A[k, j]
        m = X3[:, 0:1, :] * A[0:1, :, :]
        for k in range(1, N):
            m = m + X3[:, k:k + 1, :] * A[k:k + 1, :, :]
        woff = _OFF_CONV + layer * H
        # One batched [N*N, H] @ [H, H] MXU matmul for all roots; bf16 operands,
        # f32 accumulation.
        t = jnp.dot(m.reshape(N * N, H).astype(bf16), wm_ref[woff:woff + H],
                    preferred_element_type=f32) \
            + b_ref[_B_CONV + layer:_B_CONV + layer + 1]
        X3 = X3 + jnp.maximum(t, 0.0).reshape(N, N, H) * maskH   # masked residual

    # -- lpool: mean over existing subgraph members ----------------------------
    summed = jnp.sum(X3, axis=1)                                  # [N, H] (X3 already 0 at masked tuples)
    cnt = jnp.sum(mask, axis=1, keepdims=True)                    # [N, 1]
    pooled = summed / jnp.maximum(cnt, 1.0)

    # -- poolmlp (Linear+ReLU), graph 'sum' pool, 2-layer pred MLP -------------
    y = jnp.dot(pooled.astype(bf16), wm_ref[_OFF_POOL:_OFF_POOL + H],
                preferred_element_type=f32) + b_ref[_B_POOL:_B_POOL + 1]
    y = jnp.maximum(y, 0.0)
    hg = jnp.dot(bhot.astype(bf16), y.astype(bf16),
                 preferred_element_type=f32)                      # [8, H]; rows >= G are 0
    h1 = jnp.dot(hg.astype(bf16), wm_ref[_OFF_P1:_OFF_P1 + H],
                 preferred_element_type=f32) + b_ref[_B_P1:_B_P1 + 1]
    h1 = jnp.maximum(h1, 0.0)
    # Lane-dense [8, 128] store (valid region [:G, :NUM_TASKS] sliced in wrapper).
    out_ref[0] = jnp.dot(h1.astype(bf16), wm_ref[_OFF_P2:_OFF_P2 + H],
                         preferred_element_type=f32) + b_ref[_B_P2:_B_P2 + 1]


# ---------------------------------------------------------------- wrappers --
def _pack_weights(params):
    """Pack all weight matrices into one bf16 [_WROWS, H] slab and all biases
    into one f32 [_BROWS, H] slab (single DMA each, resident across grid steps)."""
    def pad_lanes(w):
        return jnp.pad(w, ((0, 0), (0, H - w.shape[1])))
    mats = [params['w_t0'], params['w_t1']]
    mats += [params['w_conv'][l] for l in range(NUM_LAYER)]
    mats += [params['w_pool'], params['w_pred1'], pad_lanes(params['w_pred2'])]
    wm = jnp.concatenate(mats, axis=0).astype(jnp.bfloat16)        # [(5+L)*H, H]

    bs = [params['b_t0'], params['b_t1']]
    bs += [params['b_conv'][l] for l in range(NUM_LAYER)]
    bs += [params['b_pool'], params['b_pred1'], pad_lanes(params['b_pred2'])]
    b = jnp.concatenate(bs, axis=0).astype(jnp.float32)            # [5+L, H]
    return wm, b


def sp_model_fused(x_emb, axt, misc, wm, b):
    out = pl.pallas_call(
        _spmodel_kernel,
        out_shape=jax.ShapeDtypeStruct((S, 8, 128), jnp.float32),  # lane-dense output slab
        grid=(S,),
        in_specs=[
            pl.BlockSpec((1, N, H), lambda s: (s, 0, 0)),           # node embeddings
            pl.BlockSpec((1, 2 * N, N, H), lambda s: (s, 0, 0, 0)), # [A | tuple-feat] slab
            pl.BlockSpec((1, N + 8, N), lambda s: (s, 0, 0)),       # [mask | graph one-hot]
            pl.BlockSpec((_WROWS, H), lambda s: (0, 0)),            # bf16 weight slab (resident)
            pl.BlockSpec((_BROWS, H), lambda s: (0, 0)),            # f32 bias slab (resident)
        ],
        out_specs=pl.BlockSpec((1, 8, 128), lambda s: (s, 0, 0)),
        compiler_params=pltpu.CompilerParams(
            dimension_semantics=("parallel",)),   # shards the sample axis over TCs on v7x
    )(x_emb, axt, misc, wm, b)
    return out[:, :G, :NUM_TASKS]                                   # [S, G, NUM_TASKS]


def init_params(key):
    ks = jax.random.split(key, 9)
    s = 1.0 / jnp.sqrt(jnp.float32(H))
    return {
        'emb_x':  jax.random.normal(ks[0], (32, H), jnp.float32),
        'emb_ea': jax.random.normal(ks[1], (16, H), jnp.float32),
        'emb_tf': jax.random.normal(ks[2], (16, H), jnp.float32),
        'w_t0': jax.random.normal(ks[3], (H, H), jnp.float32) * s,
        'b_t0': jnp.zeros((1, H), jnp.float32),
        'w_t1': jax.random.normal(ks[4], (H, H), jnp.float32) * s,
        'b_t1': jnp.zeros((1, H), jnp.float32),
        'w_conv': jax.random.normal(ks[5], (NUM_LAYER, H, H), jnp.float32) * s,
        'b_conv': jnp.full((NUM_LAYER, 1, H), 0.01, jnp.float32),
        'w_pool': jax.random.normal(ks[6], (H, H), jnp.float32) * s,
        'b_pool': jnp.zeros((1, H), jnp.float32),
        'w_pred1': jax.random.normal(ks[7], (H, H), jnp.float32) * s,
        'b_pred1': jnp.zeros((1, H), jnp.float32),
        'w_pred2': jax.random.normal(ks[8], (H, NUM_TASKS), jnp.float32) * s,
        'b_pred2': jnp.zeros((1, NUM_TASKS), jnp.float32),
    }


def sp_model_forward(params, x_idx, a_idx, a_mask, x_tuple_idx, x_tuple_mask, batch):
    # InputEncoderSp: embedding gathers (data-dependent) stay in plain JAX ----
    x_emb = params['emb_x'][x_idx]                                      # [S, N, H]
    a_val = params['emb_ea'][a_idx] * a_mask[..., None]                 # [S, N, N, H]
    xt_emb = params['emb_tf'][x_tuple_idx] * x_tuple_mask[..., None]    # [S, N, N, H]

    # Layout plumbing only: coalesce into a few lane-dense DMA slabs.
    axt = jnp.concatenate([a_val, xt_emb], axis=1)                      # [S, 2N, N, H]
    mask = x_tuple_mask.astype(jnp.float32)                             # [S, N, N]
    bhot = (batch[:, None, :] ==
            jnp.arange(8, dtype=batch.dtype)[None, :, None]
            ).astype(jnp.float32)                                       # [S, 8, N] (rows >= G zero)
    misc = jnp.concatenate([mask, bhot], axis=1)                        # [S, N+8, N]
    wm, b = _pack_weights(params)

    return sp_model_fused(x_emb, axt, misc, wm, b)                      # [S, G, NUM_TASKS]


if __name__ == "__main__":
    key = jax.random.PRNGKey(0)
    kx, ka, kam, kxt, kxm = jax.random.split(key, 5)

    x_idx = jax.random.randint(kx, (S, N), 0, 32)                       # node feature ids
    a_idx = jax.random.randint(ka, (S, N, N), 0, 16)                    # edge attr ids
    eye = jnp.eye(N, dtype=jnp.float32)
    a_mask = (jax.random.uniform(kam, (S, N, N)) < 0.5).astype(jnp.float32)
    a_mask = a_mask * (1.0 - eye)                                       # no self loops
    x_tuple_idx = jax.random.randint(kxt, (S, N, N), 0, 16)             # tuple feature ids
    x_tuple_mask = (jax.random.uniform(kxm, (S, N, N)) < 0.6).astype(jnp.float32)
    x_tuple_mask = jnp.maximum(x_tuple_mask, eye)                       # diagonal always present
    batch = jnp.tile(jnp.array([0, 0, 0, 0, 1, 1, 1, 1], jnp.int32), (S, 1))  # node -> graph

    params = init_params(jax.random.PRNGKey(42))
    fwd = jax.jit(partial(sp_model_forward, params))
    out = fwd(x_idx, a_idx, a_mask, x_tuple_idx, x_tuple_mask, batch)
    out = jax.block_until_ready(out)
    assert out.shape == (S, G, NUM_TASKS) and out.dtype == jnp.float32
    assert bool(jnp.all(jnp.isfinite(out)))
    print("KERNEL_OK")
</pallas_src>

<mosaic_0001>
module attributes {stable_mosaic.version = 11 : i64} {
  func.func @_spmodel_kernel(%arg0: i32, %arg1: memref<1x8x128xf32, #tpu.memory_space<vmem>>, %arg2: memref<1x16x8x128xf32, #tpu.memory_space<vmem>>, %arg3: memref<1x16x8xf32, #tpu.memory_space<vmem>>, %arg4: memref<1024x128xbf16, #tpu.memory_space<vmem>>, %arg5: memref<8x128xf32, #tpu.memory_space<vmem>>, %arg6: memref<1x8x128xf32, #tpu.memory_space<vmem>>) attributes {dimension_semantics = [#tpu.dimension_semantics<parallel>], iteration_bounds = array<i64: 8>, scalar_prefetch = 0 : i64, scratch_operands = 0 : i64, tpu.core_type = #tpu.core_type<tc>, window_params = [{transform_indices = @transform_0, window_bounds = array<i64: 1, 8, 128>}, {transform_indices = @transform_1, window_bounds = array<i64: 1, 16, 8, 128>}, {transform_indices = @transform_2, window_bounds = array<i64: 1, 16, 8>}, {pipeline_mode = #tpu.pipeline_mode<synchronous>, transform_indices = @transform_3, window_bounds = array<i64: 1024, 128>}, {pipeline_mode = #tpu.pipeline_mode<synchronous>, transform_indices = @transform_4, window_bounds = array<i64: 8, 128>}, {transform_indices = @transform_5, window_bounds = array<i64: 1, 8, 128>}]} {
    %c0 = arith.constant 0 : index
    %c0_0 = arith.constant 0 : index
    %c0_1 = arith.constant 0 : index
    %0 = vector.load %arg1[%c0, %c0_0, %c0_1] : memref<1x8x128xf32, #tpu.memory_space<vmem>>, vector<1x8x128xf32>
    %1 = vector.shape_cast %0 : vector<1x8x128xf32> to vector<8x128xf32>
    %c0_2 = arith.constant 0 : index
    %c0_3 = arith.constant 0 : index
    %c0_4 = arith.constant 0 : index
    %c0_5 = arith.constant 0 : index
    %2 = vector.load %arg2[%c0_2, %c0_3, %c0_4, %c0_5] : memref<1x16x8x128xf32, #tpu.memory_space<vmem>>, vector<1x16x8x128xf32>
    %3 = vector.shape_cast %2 : vector<1x16x8x128xf32> to vector<16x8x128xf32>
    %4 = vector.extract_strided_slice %3 {offsets = [0, 0, 0], sizes = [8, 8, 128], strides = [1, 1, 1]} : vector<16x8x128xf32> to vector<8x8x128xf32>
    %5 = vector.extract_strided_slice %3 {offsets = [8, 0, 0], sizes = [8, 8, 128], strides = [1, 1, 1]} : vector<16x8x128xf32> to vector<8x8x128xf32>
    %c0_6 = arith.constant 0 : index
    %c0_7 = arith.constant 0 : index
    %c0_8 = arith.constant 0 : index
    %6 = vector.load %arg3[%c0_6, %c0_7, %c0_8] : memref<1x16x8xf32, #tpu.memory_space<vmem>>, vector<1x16x8xf32>
    %7 = vector.shape_cast %6 : vector<1x16x8xf32> to vector<16x8xf32>
    %8 = vector.extract_strided_slice %7 {offsets = [0, 0], sizes = [8, 8], strides = [1, 1]} : vector<16x8xf32> to vector<8x8xf32>
    %9 = vector.extract_strided_slice %7 {offsets = [8, 0], sizes = [8, 8], strides = [1, 1]} : vector<16x8xf32> to vector<8x8xf32>
    %10 = arith.truncf %1 : vector<8x128xf32> to vector<8x128xbf16>
    %c0_9 = arith.constant 0 : index
    %c0_10 = arith.constant 0 : index
    %11 = vector.load %arg4[%c0_9, %c0_10] : memref<1024x128xbf16, #tpu.memory_space<vmem>>, vector<128x128xbf16>
    %cst = arith.constant dense<0.000000e+00> : vector<8x128xf32>
    %12 = tpu.matmul %10, %11, %cst {dimension_numbers = #tpu.dot_dimension_numbers<[1], [0], [0], [1], [0, 0, 1, 1], [], []>} : vector<8x128xbf16>, vector<128x128xbf16>, vector<8x128xf32> -> vector<8x128xf32>
    %c0_11 = arith.constant 0 : index
    %c0_12 = arith.constant 0 : index
    %13 = vector.load %arg5[%c0_11, %c0_12] : memref<8x128xf32, #tpu.memory_space<vmem>>, vector<1x128xf32>
    %14 = vector.broadcast %13 : vector<1x128xf32> to vector<8x128xf32>
    %15 = arith.addf %12, %14 : vector<8x128xf32>
    %c128 = arith.constant 128 : index
    %c0_13 = arith.constant 0 : index
    %16 = vector.load %arg4[%c128, %c0_13] : memref<1024x128xbf16, #tpu.memory_space<vmem>>, vector<128x128xbf16>
    %cst_14 = arith.constant dense<0.000000e+00> : vector<8x128xf32>
    %17 = tpu.matmul %10, %16, %cst_14 {dimension_numbers = #tpu.dot_dimension_numbers<[1], [0], [0], [1], [0, 0, 1, 1], [], []>} : vector<8x128xbf16>, vector<128x128xbf16>, vector<8x128xf32> -> vector<8x128xf32>
    %c1 = arith.constant 1 : index
    %c0_15 = arith.constant 0 : index
    %18 = vector.load %arg5[%c1, %c0_15] : memref<8x128xf32, #tpu.memory_space<vmem>>, vector<1x128xf32>
    %19 = vector.broadcast %18 : vector<1x128xf32> to vector<8x128xf32>
    %20 = arith.addf %17, %19 : vector<8x128xf32>
    %21 = vector.shape_cast %15 : vector<8x128xf32> to vector<8x1x128xf32>
    %22 = vector.shape_cast %21 : vector<8x1x128xf32> to vector<8x1x128xf32>
    %23 = vector.broadcast %22 : vector<8x1x128xf32> to vector<8x8x128xf32>
    %24 = vector.shape_cast %20 : vector<8x128xf32> to vector<1x8x128xf32>
    %25 = vector.shape_cast %24 : vector<1x8x128xf32> to vector<1x8x128xf32>
    %26 = vector.broadcast %25 : vector<1x8x128xf32> to vector<8x8x128xf32>
    %27 = arith.mulf %23, %26 : vector<8x8x128xf32>
    %28 = arith.mulf %27, %5 : vector<8x8x128xf32>
    %29 = vector.shape_cast %8 : vector<8x8xf32> to vector<8x8x1xf32>
    %30 = vector.shape_cast %29 : vector<8x8x1xf32> to vector<8x8x1xf32>
    %31 = vector.broadcast %30 : vector<8x8x1xf32> to vector<8x8x128xf32>
    %32 = vector.extract_strided_slice %28 {offsets = [0, 0, 0], sizes = [8, 1, 128], strides = [1, 1, 1]} : vector<8x8x128xf32> to vector<8x1x128xf32>
    %33 = vector.extract_strided_slice %4 {offsets = [0, 0, 0], sizes = [1, 8, 128], strides = [1, 1, 1]} : vector<8x8x128xf32> to vector<1x8x128xf32>
    %34 = vector.broadcast %32 : vector<8x1x128xf32> to vector<8x8x128xf32>
    %35 = vector.broadcast %33 : vector<1x8x128xf32> to vector<8x8x128xf32>
    %36 = arith.mulf %34, %35 : vector<8x8x128xf32>
    %37 = vector.extract_strided_slice %28 {offsets = [0, 1, 0], sizes = [8, 1, 128], strides = [1, 1, 1]} : vector<8x8x128xf32> to vector<8x1x128xf32>
    %38 = vector.extract_strided_slice %4 {offsets = [1, 0, 0], sizes = [1, 8, 128], strides = [1, 1, 1]} : vector<8x8x128xf32> to vector<1x8x128xf32>
    %39 = vector.broadcast %37 : vector<8x1x128xf32> to vector<8x8x128xf32>
    %40 = vector.broadcast %38 : vector<1x8x128xf32> to vector<8x8x128xf32>
    %41 = arith.mulf %39, %40 : vector<8x8x128xf32>
    %42 = arith.addf %36, %41 : vector<8x8x128xf32>
    %43 = vector.extract_strided_slice %28 {offsets = [0, 2, 0], sizes = [8, 1, 128], strides = [1, 1, 1]} : vector<8x8x128xf32> to vector<8x1x128xf32>
    %44 = vector.extract_strided_slice %4 {offsets = [2, 0, 0], sizes = [1, 8, 128], strides = [1, 1, 1]} : vector<8x8x128xf32> to vector<1x8x128xf32>
    %45 = vector.broadcast %43 : vector<8x1x128xf32> to vector<8x8x128xf32>
    %46 = vector.broadcast %44 : vector<1x8x128xf32> to vector<8x8x128xf32>
    %47 = arith.mulf %45, %46 : vector<8x8x128xf32>
    %48 = arith.addf %42, %47 : vector<8x8x128xf32>
    %49 = vector.extract_strided_slice %28 {offsets = [0, 3, 0], sizes = [8, 1, 128], strides = [1, 1, 1]} : vector<8x8x128xf32> to vector<8x1x128xf32>
    %50 = vector.extract_strided_slice %4 {offsets = [3, 0, 0], sizes = [1, 8, 128], strides = [1, 1, 1]} : vector<8x8x128xf32> to vector<1x8x128xf32>
    %51 = vector.broadcast %49 : vector<8x1x128xf32> to vector<8x8x128xf32>
    %52 = vector.broadcast %50 : vector<1x8x128xf32> to vector<8x8x128xf32>
    %53 = arith.mulf %51, %52 : vector<8x8x128xf32>
    %54 = arith.addf %48, %53 : vector<8x8x128xf32>
    %55 = vector.extract_strided_slice %28 {offsets = [0, 4, 0], sizes = [8, 1, 128], strides = [1, 1, 1]} : vector<8x8x128xf32> to vector<8x1x128xf32>
    %56 = vector.extract_strided_slice %4 {offsets = [4, 0, 0], sizes = [1, 8, 128], strides = [1, 1, 1]} : vector<8x8x128xf32> to vector<1x8x128xf32>
    %57 = vector.broadcast %55 : vector<8x1x128xf32> to vector<8x8x128xf32>
    %58 = vector.broadcast %56 : vector<1x8x128xf32> to vector<8x8x128xf32>
    %59 = arith.mulf %57, %58 : vector<8x8x128xf32>
    %60 = arith.addf %54, %59 : vector<8x8x128xf32>
    %61 = vector.extract_strided_slice %28 {offsets = [0, 5, 0], sizes = [8, 1, 128], strides = [1, 1, 1]} : vector<8x8x128xf32> to vector<8x1x128xf32>
    %62 = vector.extract_strided_slice %4 {offsets = [5, 0, 0], sizes = [1, 8, 128], strides = [1, 1, 1]} : vector<8x8x128xf32> to vector<1x8x128xf32>
    %63 = vector.broadcast %61 : vector<8x1x128xf32> to vector<8x8x128xf32>
    %64 = vector.broadcast %62 : vector<1x8x128xf32> to vector<8x8x128xf32>
    %65 = arith.mulf %63, %64 : vector<8x8x128xf32>
    %66 = arith.addf %60, %65 : vector<8x8x128xf32>
    %67 = vector.extract_strided_slice %28 {offsets = [0, 6, 0], sizes = [8, 1, 128], strides = [1, 1, 1]} : vector<8x8x128xf32> to vector<8x1x128xf32>
    %68 = vector.extract_strided_slice %4 {offsets = [6, 0, 0], sizes = [1, 8, 128], strides = [1, 1, 1]} : vector<8x8x128xf32> to vector<1x8x128xf32>
    %69 = vector.broadcast %67 : vector<8x1x128xf32> to vector<8x8x128xf32>
    %70 = vector.broadcast %68 : vector<1x8x128xf32> to vector<8x8x128xf32>
    %71 = arith.mulf %69, %70 : vector<8x8x128xf32>
    %72 = arith.addf %66, %71 : vector<8x8x128xf32>
    %73 = vector.extract_strided_slice %28 {offsets = [0, 7, 0], sizes = [8, 1, 128], strides = [1, 1, 1]} : vector<8x8x128xf32> to vector<8x1x128xf32>
    %74 = vector.extract_strided_slice %4 {offsets = [7, 0, 0], sizes = [1, 8, 128], strides = [1, 1, 1]} : vector<8x8x128xf32> to vector<1x8x128xf32>
    %75 = vector.broadcast %73 : vector<8x1x128xf32> to vector<8x8x128xf32>
    %76 = vector.broadcast %74 : vector<1x8x128xf32> to vector<8x8x128xf32>
    %77 = arith.mulf %75, %76 : vector<8x8x128xf32>
    %78 = arith.addf %72, %77 : vector<8x8x128xf32>
    %79 = vector.shape_cast %78 : vector<8x8x128xf32> to vector<64x128xf32>
    %80 = arith.truncf %79 : vector<64x128xf32> to vector<64x128xbf16>
    %c256 = arith.constant 256 : index
    %c0_16 = arith.constant 0 : index
    %81 = vector.load %arg4[%c256, %c0_16] : memref<1024x128xbf16, #tpu.memory_space<vmem>>, vector<128x128xbf16>
    %cst_17 = arith.constant dense<0.000000e+00> : vector<64x128xf32>
    %82 = tpu.matmul %80, %81, %cst_17 {dimension_numbers = #tpu.dot_dimension_numbers<[1], [0], [0], [1], [0, 0, 1, 1], [], []>} : vector<64x128xbf16>, vector<128x128xbf16>, vector<64x128xf32> -> vector<64x128xf32>
    %c2 = arith.constant 2 : index
    %c0_18 = arith.constant 0 : index
    %83 = vector.load %arg5[%c2, %c0_18] : memref<8x128xf32, #tpu.memory_space<vmem>>, vector<1x128xf32>
    %84 = vector.broadcast %83 : vector<1x128xf32> to vector<64x128xf32>
    %85 = arith.addf %82, %84 : vector<64x128xf32>
    %cst_19 = arith.constant 0.000000e+00 : f32
    %86 = vector.broadcast %cst_19 : f32 to vector<64x128xf32>
    %87 = arith.maximumf %85, %86 : vector<64x128xf32>
    %88 = vector.shape_cast %87 : vector<64x128xf32> to vector<8x8x128xf32>
    %89 = arith.mulf %88, %31 : vector<8x8x128xf32>
    %90 = arith.addf %28, %89 : vector<8x8x128xf32>
    %91 = vector.extract_strided_slice %90 {offsets = [0, 0, 0], sizes = [8, 1, 128], strides = [1, 1, 1]} : vector<8x8x128xf32> to vector<8x1x128xf32>
    %92 = vector.extract_strided_slice %4 {offsets = [0, 0, 0], sizes = [1, 8, 128], strides = [1, 1, 1]} : vector<8x8x128xf32> to vector<1x8x128xf32>
    %93 = vector.broadcast %91 : vector<8x1x128xf32> to vector<8x8x128xf32>
    %94 = vector.broadcast %92 : vector<1x8x128xf32> to vector<8x8x128xf32>
    %95 = arith.mulf %93, %94 : vector<8x8x128xf32>
    %96 = vector.extract_strided_slice %90 {offsets = [0, 1, 0], sizes = [8, 1, 128], strides = [1, 1, 1]} : vector<8x8x128xf32> to vector<8x1x128xf32>
    %97 = vector.extract_strided_slice %4 {offsets = [1, 0, 0], sizes = [1, 8, 128], strides = [1, 1, 1]} : vector<8x8x128xf32> to vector<1x8x128xf32>
    %98 = vector.broadcast %96 : vector<8x1x128xf32> to vector<8x8x128xf32>
    %99 = vector.broadcast %97 : vector<1x8x128xf32> to vector<8x8x128xf32>
    %100 = arith.mulf %98, %99 : vector<8x8x128xf32>
    %101 = arith.addf %95, %100 : vector<8x8x128xf32>
    %102 = vector.extract_strided_slice %90 {offsets = [0, 2, 0], sizes = [8, 1, 128], strides = [1, 1, 1]} : vector<8x8x128xf32> to vector<8x1x128xf32>
    %103 = vector.extract_strided_slice %4 {offsets = [2, 0, 0], sizes = [1, 8, 128], strides = [1, 1, 1]} : vector<8x8x128xf32> to vector<1x8x128xf32>
    %104 = vector.broadcast %102 : vector<8x1x128xf32> to vector<8x8x128xf32>
    %105 = vector.broadcast %103 : vector<1x8x128xf32> to vector<8x8x128xf32>
    %106 = arith.mulf %104, %105 : vector<8x8x128xf32>
    %107 = arith.addf %101, %106 : vector<8x8x128xf32>
    %108 = vector.extract_strided_slice %90 {offsets = [0, 3, 0], sizes = [8, 1, 128], strides = [1, 1, 1]} : vector<8x8x128xf32> to vector<8x1x128xf32>
    %109 = vector.extract_strided_slice %4 {offsets = [3, 0, 0], sizes = [1, 8, 128], strides = [1, 1, 1]} : vector<8x8x128xf32> to vector<1x8x128xf32>
    %110 = vector.broadcast %108 : vector<8x1x128xf32> to vector<8x8x128xf32>
    %111 = vector.broadcast %109 : vector<1x8x128xf32> to vector<8x8x128xf32>
    %112 = arith.mulf %110, %111 : vector<8x8x128xf32>
    %113 = arith.addf %107, %112 : vector<8x8x128xf32>
    %114 = vector.extract_strided_slice %90 {offsets = [0, 4, 0], sizes = [8, 1, 128], strides = [1, 1, 1]} : vector<8x8x128xf32> to vector<8x1x128xf32>
    %115 = vector.extract_strided_slice %4 {offsets = [4, 0, 0], sizes = [1, 8, 128], strides = [1, 1, 1]} : vector<8x8x128xf32> to vector<1x8x128xf32>
    %116 = vector.broadcast %114 : vector<8x1x128xf32> to vector<8x8x128xf32>
    %117 = vector.broadcast %115 : vector<1x8x128xf32> to vector<8x8x128xf32>
    %118 = arith.mulf %116, %117 : vector<8x8x128xf32>
    %119 = arith.addf %113, %118 : vector<8x8x128xf32>
    %120 = vector.extract_strided_slice %90 {offsets = [0, 5, 0], sizes = [8, 1, 128], strides = [1, 1, 1]} : vector<8x8x128xf32> to vector<8x1x128xf32>
    %121 = vector.extract_strided_slice %4 {offsets = [5, 0, 0], sizes = [1, 8, 128], strides = [1, 1, 1]} : vector<8x8x128xf32> to vector<1x8x128xf32>
    %122 = vector.broadcast %120 : vector<8x1x128xf32> to vector<8x8x128xf32>
    %123 = vector.broadcast %121 : vector<1x8x128xf32> to vector<8x8x128xf32>
    %124 = arith.mulf %122, %123 : vector<8x8x128xf32>
    %125 = arith.addf %119, %124 : vector<8x8x128xf32>
    %126 = vector.extract_strided_slice %90 {offsets = [0, 6, 0], sizes = [8, 1, 128], strides = [1, 1, 1]} : vector<8x8x128xf32> to vector<8x1x128xf32>
    %127 = vector.extract_strided_slice %4 {offsets = [6, 0, 0], sizes = [1, 8, 128], strides = [1, 1, 1]} : vector<8x8x128xf32> to vector<1x8x128xf32>
    %128 = vector.broadcast %126 : vector<8x1x128xf32> to vector<8x8x128xf32>
    %129 = vector.broadcast %127 : vector<1x8x128xf32> to vector<8x8x128xf32>
    %130 = arith.mulf %128, %129 : vector<8x8x128xf32>
    %131 = arith.addf %125, %130 : vector<8x8x128xf32>
    %132 = vector.extract_strided_slice %90 {offsets = [0, 7, 0], sizes = [8, 1, 128], strides = [1, 1, 1]} : vector<8x8x128xf32> to vector<8x1x128xf32>
    %133 = vector.extract_strided_slice %4 {offsets = [7, 0, 0], sizes = [1, 8, 128], strides = [1, 1, 1]} : vector<8x8x128xf32> to vector<1x8x128xf32>
    %134 = vector.broadcast %132 : vector<8x1x128xf32> to vector<8x8x128xf32>
    %135 = vector.broadcast %133 : vector<1x8x128xf32> to vector<8x8x128xf32>
    %136 = arith.mulf %134, %135 : vector<8x8x128xf32>
    %137 = arith.addf %131, %136 : vector<8x8x128xf32>
    %138 = vector.shape_cast %137 : vector<8x8x128xf32> to vector<64x128xf32>
    %139 = arith.truncf %138 : vector<64x128xf32> to vector<64x128xbf16>
    %c384 = arith.constant 384 : index
    %c0_20 = arith.constant 0 : index
    %140 = vector.load %arg4[%c384, %c0_20] : memref<1024x128xbf16, #tpu.memory_space<vmem>>, vector<128x128xbf16>
    %cst_21 = arith.constant dense<0.000000e+00> : vector<64x128xf32>
    %141 = tpu.matmul %139, %140, %cst_21 {dimension_numbers = #tpu.dot_dimension_numbers<[1], [0], [0], [1], [0, 0, 1, 1], [], []>} : vector<64x128xbf16>, vector<128x128xbf16>, vector<64x128xf32> -> vector<64x128xf32>
    %c3 = arith.constant 3 : index
    %c0_22 = arith.constant 0 : index
    %142 = vector.load %arg5[%c3, %c0_22] : memref<8x128xf32, #tpu.memory_space<vmem>>, vector<1x128xf32>
    %143 = vector.broadcast %142 : vector<1x128xf32> to vector<64x128xf32>
    %144 = arith.addf %141, %143 : vector<64x128xf32>
    %cst_23 = arith.constant 0.000000e+00 : f32
    %145 = vector.broadcast %cst_23 : f32 to vector<64x128xf32>
    %146 = arith.maximumf %144, %145 : vector<64x128xf32>
    %147 = vector.shape_cast %146 : vector<64x128xf32> to vector<8x8x128xf32>
    %148 = arith.mulf %147, %31 : vector<8x8x128xf32>
    %149 = arith.addf %90, %148 : vector<8x8x128xf32>
    %150 = vector.extract_strided_slice %149 {offsets = [0, 0, 0], sizes = [8, 1, 128], strides = [1, 1, 1]} : vector<8x8x128xf32> to vector<8x1x128xf32>
    %151 = vector.extract_strided_slice %4 {offsets = [0, 0, 0], sizes = [1, 8, 128], strides = [1, 1, 1]} : vector<8x8x128xf32> to vector<1x8x128xf32>
    %152 = vector.broadcast %150 : vector<8x1x128xf32> to vector<8x8x128xf32>
    %153 = vector.broadcast %151 : vector<1x8x128xf32> to vector<8x8x128xf32>
    %154 = arith.mulf %152, %153 : vector<8x8x128xf32>
    %155 = vector.extract_strided_slice %149 {offsets = [0, 1, 0], sizes = [8, 1, 128], strides = [1, 1, 1]} : vector<8x8x128xf32> to vector<8x1x128xf32>
    %156 = vector.extract_strided_slice %4 {offsets = [1, 0, 0], sizes = [1, 8, 128], strides = [1, 1, 1]} : vector<8x8x128xf32> to vector<1x8x128xf32>
    %157 = vector.broadcast %155 : vector<8x1x128xf32> to vector<8x8x128xf32>
    %158 = vector.broadcast %156 : vector<1x8x128xf32> to vector<8x8x128xf32>
    %159 = arith.mulf %157, %158 : vector<8x8x128xf32>
    %160 = arith.addf %154, %159 : vector<8x8x128xf32>
    %161 = vector.extract_strided_slice %149 {offsets = [0, 2, 0], sizes = [8, 1, 128], strides = [1, 1, 1]} : vector<8x8x128xf32> to vector<8x1x128xf32>
    %162 = vector.extract_strided_slice %4 {offsets = [2, 0, 0], sizes = [1, 8, 128], strides = [1, 1, 1]} : vector<8x8x128xf32> to vector<1x8x128xf32>
    %163 = vector.broadcast %161 : vector<8x1x128xf32> to vector<8x8x128xf32>
    %164 = vector.broadcast %162 : vector<1x8x128xf32> to vector<8x8x128xf32>
    %165 = arith.mulf %163, %164 : vector<8x8x128xf32>
    %166 = arith.addf %160, %165 : vector<8x8x128xf32>
    %167 = vector.extract_strided_slice %149 {offsets = [0, 3, 0], sizes = [8, 1, 128], strides = [1, 1, 1]} : vector<8x8x128xf32> to vector<8x1x128xf32>
    %168 = vector.extract_strided_slice %4 {offsets = [3, 0, 0], sizes = [1, 8, 128], strides = [1, 1, 1]} : vector<8x8x128xf32> to vector<1x8x128xf32>
    %169 = vector.broadcast %167 : vector<8x1x128xf32> to vector<8x8x128xf32>
    %170 = vector.broadcast %168 : vector<1x8x128xf32> to vector<8x8x128xf32>
    %171 = arith.mulf %169, %170 : vector<8x8x128xf32>
    %172 = arith.addf %166, %171 : vector<8x8x128xf32>
    %173 = vector.extract_strided_slice %149 {offsets = [0, 4, 0], sizes = [8, 1, 128], strides = [1, 1, 1]} : vector<8x8x128xf32> to vector<8x1x128xf32>
    %174 = vector.extract_strided_slice %4 {offsets = [4, 0, 0], sizes = [1, 8, 128], strides = [1, 1, 1]} : vector<8x8x128xf32> to vector<1x8x128xf32>
    %175 = vector.broadcast %173 : vector<8x1x128xf32> to vector<8x8x128xf32>
    %176 = vector.broadcast %174 : vector<1x8x128xf32> to vector<8x8x128xf32>
    %177 = arith.mulf %175, %176 : vector<8x8x128xf32>
    %178 = arith.addf %172, %177 : vector<8x8x128xf32>
    %179 = vector.extract_strided_slice %149 {offsets = [0, 5, 0], sizes = [8, 1, 128], strides = [1, 1, 1]} : vector<8x8x128xf32> to vector<8x1x128xf32>
    %180 = vector.extract_strided_slice %4 {offsets = [5, 0, 0], sizes = [1, 8, 128], strides = [1, 1, 1]} : vector<8x8x128xf32> to vector<1x8x128xf32>
    %181 = vector.broadcast %179 : vector<8x1x128xf32> to vector<8x8x128xf32>
    %182 = vector.broadcast %180 : vector<1x8x128xf32> to vector<8x8x128xf32>
    %183 = arith.mulf %181, %182 : vector<8x8x128xf32>
    %184 = arith.addf %178, %183 : vector<8x8x128xf32>
    %185 = vector.extract_strided_slice %149 {offsets = [0, 6, 0], sizes = [8, 1, 128], strides = [1, 1, 1]} : vector<8x8x128xf32> to vector<8x1x128xf32>
    %186 = vector.extract_strided_slice %4 {offsets = [6, 0, 0], sizes = [1, 8, 128], strides = [1, 1, 1]} : vector<8x8x128xf32> to vector<1x8x128xf32>
    %187 = vector.broadcast %185 : vector<8x1x128xf32> to vector<8x8x128xf32>
    %188 = vector.broadcast %186 : vector<1x8x128xf32> to vector<8x8x128xf32>
    %189 = arith.mulf %187, %188 : vector<8x8x128xf32>
    %190 = arith.addf %184, %189 : vector<8x8x128xf32>
    %191 = vector.extract_strided_slice %149 {offsets = [0, 7, 0], sizes = [8, 1, 128], strides = [1, 1, 1]} : vector<8x8x128xf32> to vector<8x1x128xf32>
    %192 = vector.extract_strided_slice %4 {offsets = [7, 0, 0], sizes = [1, 8, 128], strides = [1, 1, 1]} : vector<8x8x128xf32> to vector<1x8x128xf32>
    %193 = vector.broadcast %191 : vector<8x1x128xf32> to vector<8x8x128xf32>
    %194 = vector.broadcast %192 : vector<1x8x128xf32> to vector<8x8x128xf32>
    %195 = arith.mulf %193, %194 : vector<8x8x128xf32>
    %196 = arith.addf %190, %195 : vector<8x8x128xf32>
    %197 = vector.shape_cast %196 : vector<8x8x128xf32> to vector<64x128xf32>
    %198 = arith.truncf %197 : vector<64x128xf32> to vector<64x128xbf16>
    %c512 = arith.constant 512 : index
    %c0_24 = arith.constant 0 : index
    %199 = vector.load %arg4[%c512, %c0_24] : memref<1024x128xbf16, #tpu.memory_space<vmem>>, vector<128x128xbf16>
    %cst_25 = arith.constant dense<0.000000e+00> : vector<64x128xf32>
    %200 = tpu.matmul %198, %199, %cst_25 {dimension_numbers = #tpu.dot_dimension_numbers<[1], [0], [0], [1], [0, 0, 1, 1], [], []>} : vector<64x128xbf16>, vector<128x128xbf16>, vector<64x128xf32> -> vector<64x128xf32>
    %c4 = arith.constant 4 : index
    %c0_26 = arith.constant 0 : index
    %201 = vector.load %arg5[%c4, %c0_26] : memref<8x128xf32, #tpu.memory_space<vmem>>, vector<1x128xf32>
    %202 = vector.broadcast %201 : vector<1x128xf32> to vector<64x128xf32>
    %203 = arith.addf %200, %202 : vector<64x128xf32>
    %cst_27 = arith.constant 0.000000e+00 : f32
    %204 = vector.broadcast %cst_27 : f32 to vector<64x128xf32>
    %205 = arith.maximumf %203, %204 : vector<64x128xf32>
    %206 = vector.shape_cast %205 : vector<64x128xf32> to vector<8x8x128xf32>
    %207 = arith.mulf %206, %31 : vector<8x8x128xf32>
    %208 = arith.addf %149, %207 : vector<8x8x128xf32>
    %cst_28 = arith.constant dense<0.000000e+00> : vector<8x128xf32>
    %209 = vector.multi_reduction <add>, %208, %cst_28 [1] : vector<8x8x128xf32> to vector<8x128xf32>
    %cst_29 = arith.constant dense<0.000000e+00> : vector<8xf32>
    %210 = vector.multi_reduction <add>, %8, %cst_29 [1] : vector<8x8xf32> to vector<8xf32>
    %211 = vector.shape_cast %210 : vector<8xf32> to vector<8x1xf32>
    %cst_30 = arith.constant 1.000000e+00 : f32
    %212 = vector.broadcast %cst_30 : f32 to vector<8x1xf32>
    %213 = arith.maximumf %211, %212 : vector<8x1xf32>
    %214 = vector.broadcast %213 : vector<8x1xf32> to vector<8x128xf32>
    %215 = arith.divf %209, %214 : vector<8x128xf32>
    %216 = arith.truncf %215 : vector<8x128xf32> to vector<8x128xbf16>
    %c640 = arith.constant 640 : index
    %c0_31 = arith.constant 0 : index
    %217 = vector.load %arg4[%c640, %c0_31] : memref<1024x128xbf16, #tpu.memory_space<vmem>>, vector<128x128xbf16>
    %cst_32 = arith.constant dense<0.000000e+00> : vector<8x128xf32>
    %218 = tpu.matmul %216, %217, %cst_32 {dimension_numbers = #tpu.dot_dimension_numbers<[1], [0], [0], [1], [0, 0, 1, 1], [], []>} : vector<8x128xbf16>, vector<128x128xbf16>, vector<8x128xf32> -> vector<8x128xf32>
    %c5 = arith.constant 5 : index
    %c0_33 = arith.constant 0 : index
    %219 = vector.load %arg5[%c5, %c0_33] : memref<8x128xf32, #tpu.memory_space<vmem>>, vector<1x128xf32>
    %220 = vector.broadcast %219 : vector<1x128xf32> to vector<8x128xf32>
    %221 = arith.addf %218, %220 : vector<8x128xf32>
    %cst_34 = arith.constant 0.000000e+00 : f32
    %222 = vector.broadcast %cst_34 : f32 to vector<8x128xf32>
    %223 = arith.maximumf %221, %222 : vector<8x128xf32>
    %224 = arith.truncf %9 : vector<8x8xf32> to vector<8x8xbf16>
    %225 = arith.truncf %223 : vector<8x128xf32> to vector<8x128xbf16>
    %cst_35 = arith.constant dense<0.000000e+00> : vector<8x128xf32>
    %226 = tpu.matmul %224, %225, %cst_35 {dimension_numbers = #tpu.dot_dimension_numbers<[1], [0], [0], [1], [0, 0, 1, 1], [], []>} : vector<8x8xbf16>, vector<8x128xbf16>, vector<8x128xf32> -> vector<8x128xf32>
    %227 = arith.truncf %226 : vector<8x128xf32> to vector<8x128xbf16>
    %c768 = arith.constant 768 : index
    %c0_36 = arith.constant 0 : index
    %228 = vector.load %arg4[%c768, %c0_36] : memref<1024x128xbf16, #tpu.memory_space<vmem>>, vector<128x128xbf16>
    %cst_37 = arith.constant dense<0.000000e+00> : vector<8x128xf32>
    %229 = tpu.matmul %227, %228, %cst_37 {dimension_numbers = #tpu.dot_dimension_numbers<[1], [0], [0], [1], [0, 0, 1, 1], [], []>} : vector<8x128xbf16>, vector<128x128xbf16>, vector<8x128xf32> -> vector<8x128xf32>
    %c6 = arith.constant 6 : index
    %c0_38 = arith.constant 0 : index
    %230 = vector.load %arg5[%c6, %c0_38] : memref<8x128xf32, #tpu.memory_space<vmem>>, vector<1x128xf32>
    %231 = vector.broadcast %230 : vector<1x128xf32> to vector<8x128xf32>
    %232 = arith.addf %229, %231 : vector<8x128xf32>
    %cst_39 = arith.constant 0.000000e+00 : f32
    %233 = vector.broadcast %cst_39 : f32 to vector<8x128xf32>
    %234 = arith.maximumf %232, %233 : vector<8x128xf32>
    %235 = arith.truncf %234 : vector<8x128xf32> to vector<8x128xbf16>
    %c896 = arith.constant 896 : index
    %c0_40 = arith.constant 0 : index
    %236 = vector.load %arg4[%c896, %c0_40] : memref<1024x128xbf16, #tpu.memory_space<vmem>>, vector<128x128xbf16>
    %cst_41 = arith.constant dense<0.000000e+00> : vector<8x128xf32>
    %237 = tpu.matmul %235, %236, %cst_41 {dimension_numbers = #tpu.dot_dimension_numbers<[1], [0], [0], [1], [0, 0, 1, 1], [], []>} : vector<8x128xbf16>, vector<128x128xbf16>, vector<8x128xf32> -> vector<8x128xf32>
    %c7 = arith.constant 7 : index
    %c0_42 = arith.constant 0 : index
    %238 = vector.load %arg5[%c7, %c0_42] : memref<8x128xf32, #tpu.memory_space<vmem>>, vector<1x128xf32>
    %239 = vector.broadcast %238 : vector<1x128xf32> to vector<8x128xf32>
    %240 = arith.addf %237, %239 : vector<8x128xf32>
    %c0_43 = arith.constant 0 : index
    %c0_44 = arith.constant 0 : index
    %c0_45 = arith.constant 0 : index
    %241 = vector.load %arg6[%c0_43, %c0_44, %c0_45] : memref<1x8x128xf32, #tpu.memory_space<vmem>>, vector<1x8x128xf32>
    %242 = vector.shape_cast %241 : vector<1x8x128xf32> to vector<8x128xf32>
    %243 = vector.shape_cast %240 : vector<8x128xf32> to vector<1x8x128xf32>
    tpu.vector_store %arg6[%c0_43, %c0_44, %c0_45], %243 {strides = array<i32>} : memref<1x8x128xf32, #tpu.memory_space<vmem>>, vector<1x8x128xf32>,
    return
  }
  func.func @transform_0(%arg0: i32) -> (i32, i32, i32) {
    %c0_i32 = arith.constant 0 : i32
    %c0_i32_0 = arith.constant 0 : i32
    %c0_i32_1 = arith.constant 0 : i32
    return %arg0, %c0_i32, %c0_i32_0 : i32, i32, i32
  }
  func.func @transform_1(%arg0: i32) -> (i32, i32, i32, i32) {
    %c0_i32 = arith.constant 0 : i32
    %c0_i32_0 = arith.constant 0 : i32
    %c0_i32_1 = arith.constant 0 : i32
    %c0_i32_2 = arith.constant 0 : i32
    return %arg0, %c0_i32, %c0_i32_0, %c0_i32_1 : i32, i32, i32, i32
  }
  func.func @transform_2(%arg0: i32) -> (i32, i32, i32) {
    %c0_i32 = arith.constant 0 : i32
    %c0_i32_0 = arith.constant 0 : i32
    %c0_i32_1 = arith.constant 0 : i32
    return %arg0, %c0_i32, %c0_i32_0 : i32, i32, i32
  }
  func.func @transform_3(%arg0: i32) -> (i32, i32) {
    %c0_i32 = arith.constant 0 : i32
    %c0_i32_0 = arith.constant 0 : i32
    %c0_i32_1 = arith.constant 0 : i32
    return %c0_i32, %c0_i32_0 : i32, i32
  }
  func.func @transform_4(%arg0: i32) -> (i32, i32) {
    %c0_i32 = arith.constant 0 : i32
    %c0_i32_0 = arith.constant 0 : i32
    %c0_i32_1 = arith.constant 0 : i32
    return %c0_i32, %c0_i32_0 : i32, i32
  }
  func.func @transform_5(%arg0: i32) -> (i32, i32, i32) {
    %c0_i32 = arith.constant 0 : i32
    %c0_i32_0 = arith.constant 0 : i32
    %c0_i32_1 = arith.constant 0 : i32
    return %arg0, %c0_i32, %c0_i32_0 : i32, i32, i32
  }
}

</mosaic_0001>

<llo_original>
// kernel: sp_model_forward.1
$region0: #{sp_model_forward.1}
  #allocation0 [shape = 'u32[]', space=smem, size = 0x4, offset = 0x4, fixed_abs, tag = 'smem constant byte address 0x4 - core index']
  #allocation1 [shape = 'u32[72,128]{1,0:T(1,128)}', space=vmem, size = 0x9000, scoped, tag = 'internal scratch']
  %s0 = inlined_call_operand.vmem [shape: f32[8,8,128], index: 0, kind: input, shape index: {}]
  %s1 = inlined_call_operand.vmem [shape: f32[8,16,8,128], index: 1, kind: input, shape index: {}]
  %s2 = inlined_call_operand.vmem [shape: f32[8,16,8], index: 2, kind: input, shape index: {}]
  %s3 = inlined_call_operand.vmem [shape: bf16[1024,128], index: 3, kind: input, shape index: {}]
  %s4 = inlined_call_operand.vmem [shape: f32[8,128], index: 4, kind: input, shape index: {}]
  %s5 = inlined_call_operand.vmem [shape: f32[8,8,128], index: 5, kind: output, shape index: {}]
  %s6 = sld [smem:[#allocation0]]
  $region53: #{sp_model_forward.1} parent=0
    _
  %s8 = ssub.s32 1, %s6
  %s9 = scalar_select 0, %s8, %s6
  loop: start=0, step=1, limit=10
  $region2: #{sp_model_forward.1} parent=0 // loop_pre_header
    _
  $region3: #{sp_model_forward.1} parent=0 // loop_header
    %s11 = sphi 0, %s15
    %p12 = scmp.ge.s32.totalorder %s11, 10
    %s21 = sphi 0, %s23
    %s24 = sphi 0, %s21
    %s25 = sphi 0, %s24
    %s41 = sphi 0, %s25
    %s47 = sphi 0, %s49
    %s50 = sphi 0, %s47
    %s51 = sphi 0, %s50
    %s67 = sphi 0, %s51
    %s73 = sphi 0, %s75
    %s76 = sphi 0, %s73
    %s77 = sphi 0, %s76
    %s93 = sphi 0, %s77
    %s97 = sphi 0, %s97
    %s99 = sphi 0, %s97
    %s100 = sphi 0, %s99
    %s114 = sphi 0, %s100
    %s118 = sphi 0, %s118
    %s120 = sphi 0, %s118
    %s121 = sphi 0, %s120
    %s135 = sphi 0, %s121
    %s141 = sphi 0, %s143
    %s144 = sphi 0, %s141
    %s145 = sphi 0, %s144
    %s161 = sphi 0, %s145
  $region4: #{sp_model_forward.1} parent=0 // loop_header_branch
    %14 = sbr.rel (%p12) target = $region8
  $region5: #{sp_model_forward.1} parent=0 // loop_body
    %s16 = ssub.s32 %s11, 1
    %s17 = ssub.s32 %s11, 2
    %s18 = sadd.s32 %s11, 1
    %s19 = ssub.s32 %s11, %s18
    %p20 = scmp.eq.s32.totalorder %s19, 0
    %s22 = sadd.s32 %s21, 1
    %s23 = scalar_select %p20, %s21, %s22
    %p26 = pneg %p20
    %p27 = scmp.eq.s32.totalorder %s11, 7
    %p28 = por %p26, %p27
    %p29 = scmp.ne.s32.totalorder %s21, %s24
    %p30 = scmp.eq.s32.totalorder %s11, 0
    %p31 = por %p29, %p30
    %p32 = scmp.ne.s32.totalorder %s21, %s24
    %p33 = scmp.eq.s32.totalorder %s16, 7
    %p34 = por %p32, %p33
    %p35 = scmp.ne.s32.totalorder %s24, %s25
    %p36 = scmp.eq.s32.totalorder %s16, 0
    %p37 = por %p35, %p36
    %p38 = scmp.ne.s32.totalorder %s24, %s25
    %p39 = scmp.eq.s32.totalorder %s17, 7
    %p40 = por %p38, %p39
    %p42 = scmp.ne.s32.totalorder %s25, %s41
    %p43 = scmp.eq.s32.totalorder %s17, 0
    %p44 = por %p42, %p43
    %s45 = ssub.s32 %s11, %s18
    %p46 = scmp.eq.s32.totalorder %s45, 0
    %s48 = sadd.s32 %s47, 1
    %s49 = scalar_select %p46, %s47, %s48
    %p52 = pneg %p46
    %p53 = scmp.eq.s32.totalorder %s11, 7
    %p54 = por %p52, %p53
    %p55 = scmp.ne.s32.totalorder %s47, %s50
    %p56 = scmp.eq.s32.totalorder %s11, 0
    %p57 = por %p55, %p56
    %p58 = scmp.ne.s32.totalorder %s47, %s50
    %p59 = scmp.eq.s32.totalorder %s16, 7
    %p60 = por %p58, %p59
    %p61 = scmp.ne.s32.totalorder %s50, %s51
    %p62 = scmp.eq.s32.totalorder %s16, 0
    %p63 = por %p61, %p62
    %p64 = scmp.ne.s32.totalorder %s50, %s51
    %p65 = scmp.eq.s32.totalorder %s17, 7
    %p66 = por %p64, %p65
    %p68 = scmp.ne.s32.totalorder %s51, %s67
    %p69 = scmp.eq.s32.totalorder %s17, 0
    %p70 = por %p68, %p69
    %s71 = ssub.s32 %s11, %s18
    %p72 = scmp.eq.s32.totalorder %s71, 0
    %s74 = sadd.s32 %s73, 1
    %s75 = scalar_select %p72, %s73, %s74
    %p78 = pneg %p72
    %p79 = scmp.eq.s32.totalorder %s11, 7
    %p80 = por %p78, %p79
    %p81 = scmp.ne.s32.totalorder %s73, %s76
    %p82 = scmp.eq.s32.totalorder %s11, 0
    %p83 = por %p81, %p82
    %p84 = scmp.ne.s32.totalorder %s73, %s76
    %p85 = scmp.eq.s32.totalorder %s16, 7
    %p86 = por %p84, %p85
    %p87 = scmp.ne.s32.totalorder %s76, %s77
    %p88 = scmp.eq.s32.totalorder %s16, 0
    %p89 = por %p87, %p88
    %p90 = scmp.ne.s32.totalorder %s76, %s77
    %p91 = scmp.eq.s32.totalorder %s17, 7
    %p92 = por %p90, %p91
    %p94 = scmp.ne.s32.totalorder %s77, %s93
    %p95 = scmp.eq.s32.totalorder %s17, 0
    %p96 = por %p94, %p95
    %s98 = sadd.s32 %s97, 1
    %p101 = scmp.eq.s32.totalorder %s11, 7
    %p102 = scmp.ne.s32.totalorder %s97, %s99
    %p103 = scmp.eq.s32.totalorder %s11, 0
    %p104 = por %p102, %p103
    %p105 = scmp.ne.s32.totalorder %s97, %s99
    %p106 = scmp.eq.s32.totalorder %s16, 7
    %p107 = por %p105, %p106
    %p108 = scmp.ne.s32.totalorder %s99, %s100
    %p109 = scmp.eq.s32.totalorder %s16, 0
    %p110 = por %p108, %p109
    %p111 = scmp.ne.s32.totalorder %s99, %s100
    %p112 = scmp.eq.s32.totalorder %s17, 7
    %p113 = por %p111, %p112
    %p115 = scmp.ne.s32.totalorder %s100, %s114
    %p116 = scmp.eq.s32.totalorder %s17, 0
    %p117 = por %p115, %p116
    %s119 = sadd.s32 %s118, 1
    %p122 = scmp.eq.s32.totalorder %s11, 7
    %p123 = scmp.ne.s32.totalorder %s118, %s120
    %p124 = scmp.eq.s32.totalorder %s11, 0
    %p125 = por %p123, %p124
    %p126 = scmp.ne.s32.totalorder %s118, %s120
    %p127 = scmp.eq.s32.totalorder %s16, 7
    %p128 = por %p126, %p127
    %p129 = scmp.ne.s32.totalorder %s120, %s121
    %p130 = scmp.eq.s32.totalorder %s16, 0
    %p131 = por %p129, %p130
    %p132 = scmp.ne.s32.totalorder %s120, %s121
    %p133 = scmp.eq.s32.totalorder %s17, 7
    %p134 = por %p132, %p133
    %p136 = scmp.ne.s32.totalorder %s121, %s135
    %p137 = scmp.eq.s32.totalorder %s17, 0
    %p138 = por %p136, %p137
    %s139 = ssub.s32 %s11, %s18
    %p140 = scmp.eq.s32.totalorder %s139, 0
    %s142 = sadd.s32 %s141, 1
    %s143 = scalar_select %p140, %s141, %s142
    %p146 = pneg %p140
    %p147 = scmp.eq.s32.totalorder %s11, 7
    %p148 = por %p146, %p147
    %p149 = scmp.ne.s32.totalorder %s141, %s144
    %p150 = scmp.eq.s32.totalorder %s11, 0
    %p151 = por %p149, %p150
    %p152 = scmp.ne.s32.totalorder %s141, %s144
    %p153 = scmp.eq.s32.totalorder %s16, 7
    %p154 = por %p152, %p153
    %p155 = scmp.ne.s32.totalorder %s144, %s145
    %p156 = scmp.eq.s32.totalorder %s16, 0
    %p157 = por %p155, %p156
    %p158 = scmp.ne.s32.totalorder %s144, %s145
    %p159 = scmp.eq.s32.totalorder %s17, 7
    %p160 = por %p158, %p159
    %p162 = scmp.ne.s32.totalorder %s145, %s161
    %p163 = scmp.eq.s32.totalorder %s17, 0
    %p164 = por %p162, %p163
    %p165 = scmp.le.s32.totalorder 1, %s11
    %p166 = scmp.lt.s32.totalorder %s11, 9
    %p167 = pnand %p165, %p166
    %p168 = pneg %p167
    // Predicated region
    $region9: #{sp_model_forward.1} parent=5 // pred_check
      _
    $region10: #{sp_model_forward.1} parent=5 // pred_check_branch
      %170 = sbr.rel (%p167) target = $region12
    $region11: #{sp_model_forward.1} parent=5 // pred_region
      %s171 = ssub.s32 %s11, 1
      // Predicated region
      $region13: #{sp_model_forward.1} parent=11 // pred_check
        %p172 = pneg %p110
      $region14: #{sp_model_forward.1} parent=11 // pred_check_branch
        %174 = sbr.rel (%p172) target = $region16
      $region15: #{sp_model_forward.1} parent=11 // pred_region
        _
      $region16: #{sp_model_forward.1} parent=11 // pred_fallthru
        _
      // Predicated region
      $region17: #{sp_model_forward.1} parent=11 // pred_check
        %p175 = pneg %p131
      $region18: #{sp_model_forward.1} parent=11 // pred_check_branch
        %177 = sbr.rel (%p175) target = $region20
      $region19: #{sp_model_forward.1} parent=11 // pred_region
        _
      $region20: #{sp_model_forward.1} parent=11 // pred_fallthru
        _
    $region12: #{sp_model_forward.1} parent=5 // pred_fallthru
      _
    %p178 = scmp.lt.s32.totalorder %s11, 8
    // Predicated region
    $region21: #{sp_model_forward.1} parent=5 // pred_check
      %p179 = pneg %p178
    $region22: #{sp_model_forward.1} parent=5 // pred_check_branch
      %181 = sbr.rel (%p179) target = $region24
    $region23: #{sp_model_forward.1} parent=5 // pred_region
      // Predicated region
      $region25: #{sp_model_forward.1} parent=23 // pred_check
        %p182 = pneg %p31
      $region26: #{sp_model_forward.1} parent=23 // pred_check_branch
        %184 = sbr.rel (%p182) target = $region28
      $region27: #{sp_model_forward.1} parent=23 // pred_region
        %p185 = scmp.lt.s32.totalorder %s11, 7
        %s186 = scalar_select %p185, %s11, 7
        %s187 = smul.addr %s186, 8
        %s188 = scalar_lea.vmem %s0, %s187
      $region28: #{sp_model_forward.1} parent=23 // pred_fallthru
        _
      // Predicated region
      $region29: #{sp_model_forward.1} parent=23 // pred_check
        %p189 = pneg %p57
      $region30: #{sp_model_forward.1} parent=23 // pred_check_branch
        %191 = sbr.rel (%p189) target = $region32
      $region31: #{sp_model_forward.1} parent=23 // pred_region
        %p192 = scmp.lt.s32.totalorder %s11, 7
        %s193 = scalar_select %p192, %s11, 7
        %s194 = smul.addr %s193, 16
        %s195 = smul.addr %s194, 8
        %s196 = scalar_lea.vmem %s1, %s195
      $region32: #{sp_model_forward.1} parent=23 // pred_fallthru
        _
      // Predicated region
      $region33: #{sp_model_forward.1} parent=23 // pred_check
        %p197 = pneg %p83
      $region34: #{sp_model_forward.1} parent=23 // pred_check_branch
        %199 = sbr.rel (%p197) target = $region36
      $region35: #{sp_model_forward.1} parent=23 // pred_region
        %p200 = scmp.lt.s32.totalorder %s11, 7
        %s201 = scalar_select %p200, %s11, 7
        %s202 = smul.addr %s201, 2
        %s203 = smul.addr %s202, 8
        %s204 = scalar_lea.vmem %s2, %s203
      $region36: #{sp_model_forward.1} parent=23 // pred_fallthru
        _
    $region24: #{sp_model_forward.1} parent=5 // pred_fallthru
      _
    %p205 = scmp.le.s32.totalorder 1, %s11
    %p206 = scmp.lt.s32.totalorder %s11, 9
    %p207 = pnand %p205, %p206
    %p208 = pneg %p207
    // Predicated region
    $region37: #{sp_model_forward.1} parent=5 // pred_check
      _
    $region38: #{sp_model_forward.1} parent=5 // pred_check_branch
      %210 = sbr.rel (%p207) target = $region40
    $region39: #{sp_model_forward.1} parent=5 // pred_region
      %s211 = ssub.s32 %s11, 1
      %p212 = scmp.lt.s32.totalorder %s16, 7
      %s213 = scalar_select %p212, %s16, 7
      %s214 = smul.addr %s213, 8
      %s215 = scalar_lea.vmem %s0, %s214
      %p216 = pneg %p37
      %p217 = pneg %p34
      %p218 = scmp.lt.s32.totalorder %s16, 7
      %s219 = scalar_select %p218, %s16, 7
      %s220 = smul.addr %s219, 16
      %s221 = smul.addr %s220, 8
      %s222 = scalar_lea.vmem %s1, %s221
      %p223 = pneg %p63
      %p224 = pneg %p60
      %p225 = scmp.lt.s32.totalorder %s16, 7
      %s226 = scalar_select %p225, %s16, 7
      %s227 = smul.addr %s226, 2
      %s228 = smul.addr %s227, 8
      %s229 = scalar_lea.vmem %s2, %s228
      %p230 = pneg %p89
      %p231 = pneg %p86
      %p232 = pneg %p110
      %p233 = pneg %p107
      %p234 = pneg %p131
      %p235 = pneg %p128
      %p236 = pneg %p157
      %p237 = pneg %p154
      %p238 = scmp.lt.s32.totalorder %s16, 7
      %s239 = scalar_select %p238, %s16, 7
      %s240 = smul.addr %s239, 8
      %s241 = scalar_lea.vmem %s5, %s240
      %p242 = scmp.lt.s32.totalorder %s16, 7
      %s243 = scalar_select %p242, %s16, 7
      %s244 = smul.addr %s243, 8
      %s245 = scalar_lea.vmem %s0, %s244
      %p246 = scmp.lt.s32.totalorder %s16, 7
      %s247 = scalar_select %p246, %s16, 7
      %s248 = smul.addr %s247, 16
      %s249 = smul.addr %s248, 8
      %s250 = scalar_lea.vmem %s1, %s249
      %p251 = scmp.lt.s32.totalorder %s16, 7
      %s252 = scalar_select %p251, %s16, 7
      %s253 = smul.addr %s252, 2
      %s254 = smul.addr %s253, 8
      %s255 = scalar_lea.vmem %s2, %s254
      %p256 = scmp.lt.s32.totalorder %s16, 7
      %s257 = scalar_select %p256, %s16, 7
      %s258 = smul.addr %s257, 8
      %s259 = scalar_lea.vmem %s5, %s258
      %v261 = vld [vmem:[%s245] sm:$0xff]
      %v262 = vld [vmem:[%s250] sm:$0xff]
      %v263 = vld [vmem:[%s250 + $0x8] sm:$0xff]
      %v264 = vld [vmem:[%s250 + $0x10] sm:$0xff]
      %v265 = vld [vmem:[%s250 + $0x18] sm:$0xff]
      %v266 = vld [vmem:[%s250 + $0x20] sm:$0xff]
      %v267 = vld [vmem:[%s250 + $0x28] sm:$0xff]
      %v268 = vld [vmem:[%s250 + $0x30] sm:$0xff]
      %v269 = vld [vmem:[%s250 + $0x38] sm:$0xff]
      %v270 = vld [vmem:[%s250 + $0x40] sm:$0xff]
      %v271 = vld [vmem:[%s250 + $0x48] sm:$0xff]
      %v272 = vld [vmem:[%s250 + $0x50] sm:$0xff]
      %v273 = vld [vmem:[%s250 + $0x58] sm:$0xff]
      %v274 = vld [vmem:[%s250 + $0x60] sm:$0xff]
      %v275 = vld [vmem:[%s250 + $0x68] sm:$0xff]
      %v276 = vld [vmem:[%s250 + $0x70] sm:$0xff]
      %v277 = vld [vmem:[%s250 + $0x78] sm:$0xff]
      %v278 = vld [vmem:[%s255] sm:$0xff]
      %v279 = vld [vmem:[%s255 + $0x8] sm:$0xff]
      %v280 = vpack.c.bf16 %v261, %v261
      %v281 = vld [vmem:[%s3] sm:$0xf]
      %v282 = vld [vmem:[%s3 + $0x4] sm:$0xf]
      %v283 = vld [vmem:[%s3 + $0x8] sm:$0xf]
      %v284 = vld [vmem:[%s3 + $0xc] sm:$0xf]
      %v285 = vld [vmem:[%s3 + $0x10] sm:$0xf]
      %v286 = vld [vmem:[%s3 + $0x14] sm:$0xf]
      %v287 = vld [vmem:[%s3 + $0x18] sm:$0xf]
      %v288 = vld [vmem:[%s3 + $0x1c] sm:$0xf]
      %v289 = vld [vmem:[%s3 + $0x20] sm:$0xf]
      %v290 = vld [vmem:[%s3 + $0x24] sm:$0xf]
      %v291 = vld [vmem:[%s3 + $0x28] sm:$0xf]
      %v292 = vld [vmem:[%s3 + $0x2c] sm:$0xf]
      %v293 = vld [vmem:[%s3 + $0x30] sm:$0xf]
      %v294 = vld [vmem:[%s3 + $0x34] sm:$0xf]
      %v295 = vld [vmem:[%s3 + $0x38] sm:$0xf]
      %v296 = vld [vmem:[%s3 + $0x3c] sm:$0xf]
      %v297 = vld [vmem:[%s4] sm:$0x1]
      %v298 = vperm.slane %v297, 0
      %v315 = vunpack.c.l.b16 %v281
      %v316 = vunpack.c.l.b16 %v282
      %v317 = vunpack.c.l.b16 %v283
      %v318 = vunpack.c.l.b16 %v284
      %v319 = vunpack.c.l.b16 %v285
      %v320 = vunpack.c.l.b16 %v286
      %v321 = vunpack.c.l.b16 %v287
      %v322 = vunpack.c.l.b16 %v288
      %v323 = vunpack.c.l.b16 %v289
      %v324 = vunpack.c.l.b16 %v290
      %v325 = vunpack.c.l.b16 %v291
      %v326 = vunpack.c.l.b16 %v292
      %v327 = vunpack.c.l.b16 %v293
      %v328 = vunpack.c.l.b16 %v294
      %v329 = vunpack.c.l.b16 %v295
      %v330 = vunpack.c.l.b16 %v296
      %v331 = vpack.c.b16 %v316, %v315
      %v332 = vpack.c.b16 %v318, %v317
      %v333 = vpack.c.b16 %v320, %v319
      %v334 = vpack.c.b16 %v322, %v321
      %v335 = vpack.c.b16 %v324, %v323
      %v336 = vpack.c.b16 %v326, %v325
      %v337 = vpack.c.b16 %v328, %v327
      %v338 = vpack.c.b16 %v330, %v329
      %347 = vmatpush.bf16.msra.mxu0 %v338
      %348 = vmatpush.bf16.msra.mxu0 %v337
      %349 = vmatpush.bf16.msra.mxu0 %v336
      %350 = vmatpush.bf16.msra.mxu0 %v335
      %351 = vmatpush.bf16.msra.mxu0 %v334
      %352 = vmatpush.bf16.msra.mxu0 %v333
      %353 = vmatpush.bf16.msra.mxu0 %v332
      %354 = vmatpush.bf16.msra.mxu0 %v331
      %355 = vmatmul.bf16.gmra.mxu0 %v280
      %v356 = vpop.f32.mrf.mxu0
      %v357 = vadd.f32 %v298, %v356
      %v358 = vpop.f32.mrf.mxu0
      %359 = vdwg.mxu0
      %v360 = vld [vmem:[%s3 + $0x40] sm:$0xf]
      %v361 = vld [vmem:[%s3 + $0x44] sm:$0xf]
      %v362 = vld [vmem:[%s3 + $0x48] sm:$0xf]
      %v363 = vld [vmem:[%s3 + $0x4c] sm:$0xf]
      %v364 = vld [vmem:[%s3 + $0x50] sm:$0xf]
      %v365 = vld [vmem:[%s3 + $0x54] sm:$0xf]
      %v366 = vld [vmem:[%s3 + $0x58] sm:$0xf]
      %v367 = vld [vmem:[%s3 + $0x5c] sm:$0xf]
      %v368 = vld [vmem:[%s3 + $0x60] sm:$0xf]
      %v369 = vld [vmem:[%s3 + $0x64] sm:$0xf]
      %v370 = vld [vmem:[%s3 + $0x68] sm:$0xf]
      %v371 = vld [vmem:[%s3 + $0x6c] sm:$0xf]
      %v372 = vld [vmem:[%s3 + $0x70] sm:$0xf]
      %v373 = vld [vmem:[%s3 + $0x74] sm:$0xf]
      %v374 = vld [vmem:[%s3 + $0x78] sm:$0xf]
      %v375 = vld [vmem:[%s3 + $0x7c] sm:$0xf]
      %v376 = vld [vmem:[%s4 + $0x1] sm:$0x1]
      %v377 = vperm.slane %v376, 0
      %v394 = vunpack.c.l.b16 %v360
      %v395 = vunpack.c.l.b16 %v361
      %v396 = vunpack.c.l.b16 %v362
      %v397 = vunpack.c.l.b16 %v363
      %v398 = vunpack.c.l.b16 %v364
      %v399 = vunpack.c.l.b16 %v365
      %v400 = vunpack.c.l.b16 %v366
      %v401 = vunpack.c.l.b16 %v367
      %v402 = vunpack.c.l.b16 %v368
      %v403 = vunpack.c.l.b16 %v369
      %v404 = vunpack.c.l.b16 %v370
      %v405 = vunpack.c.l.b16 %v371
      %v406 = vunpack.c.l.b16 %v372
      %v407 = vunpack.c.l.b16 %v373
      %v408 = vunpack.c.l.b16 %v374
      %v409 = vunpack.c.l.b16 %v375
      %v410 = vpack.c.b16 %v395, %v394
      %v411 = vpack.c.b16 %v397, %v396
      %v412 = vpack.c.b16 %v399, %v398
      %v413 = vpack.c.b16 %v401, %v400
      %v414 = vpack.c.b16 %v403, %v402
      %v415 = vpack.c.b16 %v405, %v404
      %v416 = vpack.c.b16 %v407, %v406
      %v417 = vpack.c.b16 %v409, %v408
      %426 = vmatpush.bf16.msra.mxu0 %v417
      %427 = vmatpush.bf16.msra.mxu0 %v416
      %428 = vmatpush.bf16.msra.mxu0 %v415
      %429 = vmatpush.bf16.msra.mxu0 %v414
      %430 = vmatpush.bf16.msra.mxu0 %v413
      %431 = vmatpush.bf16.msra.mxu0 %v412
      %432 = vmatpush.bf16.msra.mxu0 %v411
      %433 = vmatpush.bf16.msra.mxu0 %v410
      %434 = vmatmul.bf16.gmra.mxu0 %v280
      %v435 = vpop.f32.mrf.mxu0
      %v436 = vadd.f32 %v377, %v435
      %v437 = vpop.f32.mrf.mxu0
      %438 = vdwg.mxu0
      %v440 = vrot.slane %v357, 1
      %v441 = vrot.slane %v357, 2
      %v442 = vrot.slane %v357, 3
      %v443 = vrot.slane %v357, 4
      %v444 = vrot.slane %v357, 5
      %v445 = vrot.slane %v357, 6
      %v446 = vrot.slane %v357, 7
      %v447 = vperm.slane %v357, 0
      %v448 = vperm.slane %v440, 0
      %v449 = vperm.slane %v441, 0
      %v450 = vperm.slane %v442, 0
      %v451 = vperm.slane %v443, 0
      %v452 = vperm.slane %v444, 0
      %v453 = vperm.slane %v445, 0
      %v454 = vperm.slane %v446, 0
      %v463 = vmul.f32 %v447, %v436
      %v464 = vmul.f32 %v448, %v436
      %v465 = vmul.f32 %v449, %v436
      %v466 = vmul.f32 %v450, %v436
      %v467 = vmul.f32 %v451, %v436
      %v468 = vmul.f32 %v452, %v436
      %v469 = vmul.f32 %v453, %v436
      %v470 = vmul.f32 %v454, %v436
      %v471 = vmul.f32 %v463, %v270
      %v472 = vmul.f32 %v464, %v271
      %v473 = vmul.f32 %v465, %v272
      %v474 = vmul.f32 %v466, %v273
      %v475 = vmul.f32 %v467, %v274
      %v476 = vmul.f32 %v468, %v275
      %v477 = vmul.f32 %v469, %v276
      %v478 = vmul.f32 %v470, %v277
      %v479 = vperm.slane %v278, 0
      %v480 = vlaneseq
      %v481 = vshrl.u32 %v480, 7
      %483 = vset.pattern.permute.xlu0 %v481
      %484 = vperm.xlu0 %483, %v479
      %v485 = vpop.permute.xlu0 %484
      %v486 = vperm.slane %v278, 1
      %v487 = vlaneseq
      %v488 = vshrl.u32 %v487, 7
      %490 = vset.pattern.permute.xlu0 %v488
      %491 = vperm.xlu0 %490, %v486
      %v492 = vpop.permute.xlu0 %491
      %v493 = vperm.slane %v278, 2
      %v494 = vlaneseq
      %v495 = vshrl.u32 %v494, 7
      %497 = vset.pattern.permute.xlu0 %v495
      %498 = vperm.xlu0 %497, %v493
      %v499 = vpop.permute.xlu0 %498
      %v500 = vperm.slane %v278, 3
      %v501 = vlaneseq
      %v502 = vshrl.u32 %v501, 7
      %504 = vset.pattern.permute.xlu0 %v502
      %505 = vperm.xlu0 %504, %v500
      %v506 = vpop.permute.xlu0 %505
      %v507 = vperm.slane %v278, 4
      %v508 = vlaneseq
      %v509 = vshrl.u32 %v508, 7
      %511 = vset.pattern.permute.xlu0 %v509
      %512 = vperm.xlu0 %511, %v507
      %v513 = vpop.permute.xlu0 %512
      %v514 = vperm.slane %v278, 5
      %v515 = vlaneseq
      %v516 = vshrl.u32 %v515, 7
      %518 = vset.pattern.permute.xlu0 %v516
      %519 = vperm.xlu0 %518, %v514
      %v520 = vpop.permute.xlu0 %519
      %v521 = vperm.slane %v278, 6
      %v522 = vlaneseq
      %v523 = vshrl.u32 %v522, 7
      %525 = vset.pattern.permute.xlu0 %v523
      %526 = vperm.xlu0 %525, %v521
      %v527 = vpop.permute.xlu0 %526
      %v528 = vperm.slane %v278, 7
      %v529 = vlaneseq
      %v530 = vshrl.u32 %v529, 7
      %532 = vset.pattern.permute.xlu0 %v530
      %533 = vperm.xlu0 %532, %v528
      %v534 = vpop.permute.xlu0 %533
      %v535 = vperm.slane %v471, 0
      %v536 = vperm.slane %v472, 0
      %v537 = vperm.slane %v473, 0
      %v538 = vperm.slane %v474, 0
      %v539 = vperm.slane %v475, 0
      %v540 = vperm.slane %v476, 0
      %v541 = vperm.slane %v477, 0
      %v542 = vperm.slane %v478, 0
      %v543 = vmul.f32 %v535, %v262
      %v544 = vmul.f32 %v536, %v262
      %v545 = vmul.f32 %v537, %v262
      %v546 = vmul.f32 %v538, %v262
      %v547 = vmul.f32 %v539, %v262
      %v548 = vmul.f32 %v540, %v262
      %v549 = vmul.f32 %v541, %v262
      %v550 = vmul.f32 %v542, %v262
      %v551 = vperm.slane %v471, 1
      %v552 = vperm.slane %v472, 1
      %v553 = vperm.slane %v473, 1
      %v554 = vperm.slane %v474, 1
      %v555 = vperm.slane %v475, 1
      %v556 = vperm.slane %v476, 1
      %v557 = vperm.slane %v477, 1
      %v558 = vperm.slane %v478, 1
      %v559 = vmul.f32 %v551, %v263
      %v560 = vmul.f32 %v552, %v263
      %v561 = vmul.f32 %v553, %v263
      %v562 = vmul.f32 %v554, %v263
      %v563 = vmul.f32 %v555, %v263
      %v564 = vmul.f32 %v556, %v263
      %v565 = vmul.f32 %v557, %v263
      %v566 = vmul.f32 %v558, %v263
      %v567 = vadd.f32 %v543, %v559
      %v568 = vadd.f32 %v544, %v560
      %v569 = vadd.f32 %v545, %v561
      %v570 = vadd.f32 %v546, %v562
      %v571 = vadd.f32 %v547, %v563
      %v572 = vadd.f32 %v548, %v564
      %v573 = vadd.f32 %v549, %v565
      %v574 = vadd.f32 %v550, %v566
      %v575 = vperm.slane %v471, 2
      %v576 = vperm.slane %v472, 2
      %v577 = vperm.slane %v473, 2
      %v578 = vperm.slane %v474, 2
      %v579 = vperm.slane %v475, 2
      %v580 = vperm.slane %v476, 2
      %v581 = vperm.slane %v477, 2
      %v582 = vperm.slane %v478, 2
      %v583 = vmul.f32 %v575, %v264
      %v584 = vmul.f32 %v576, %v264
      %v585 = vmul.f32 %v577, %v264
      %v586 = vmul.f32 %v578, %v264
      %v587 = vmul.f32 %v579, %v264
      %v588 = vmul.f32 %v580, %v264
      %v589 = vmul.f32 %v581, %v264
      %v590 = vmul.f32 %v582, %v264
      %v591 = vadd.f32 %v567, %v583
      %v592 = vadd.f32 %v568, %v584
      %v593 = vadd.f32 %v569, %v585
      %v594 = vadd.f32 %v570, %v586
      %v595 = vadd.f32 %v571, %v587
      %v596 = vadd.f32 %v572, %v588
      %v597 = vadd.f32 %v573, %v589
      %v598 = vadd.f32 %v574, %v590
      %v599 = vperm.slane %v471, 3
      %v600 = vperm.slane %v472, 3
      %v601 = vperm.slane %v473, 3
      %v602 = vperm.slane %v474, 3
      %v603 = vperm.slane %v475, 3
      %v604 = vperm.slane %v476, 3
      %v605 = vperm.slane %v477, 3
      %v606 = vperm.slane %v478, 3
      %v607 = vmul.f32 %v599, %v265
      %v608 = vmul.f32 %v600, %v265
      %v609 = vmul.f32 %v601, %v265
      %v610 = vmul.f32 %v602, %v265
      %v611 = vmul.f32 %v603, %v265
      %v612 = vmul.f32 %v604, %v265
      %v613 = vmul.f32 %v605, %v265
      %v614 = vmul.f32 %v606, %v265
      %v615 = vadd.f32 %v591, %v607
      %v616 = vadd.f32 %v592, %v608
      %v617 = vadd.f32 %v593, %v609
      %v618 = vadd.f32 %v594, %v610
      %v619 = vadd.f32 %v595, %v611
      %v620 = vadd.f32 %v596, %v612
      %v621 = vadd.f32 %v597, %v613
      %v622 = vadd.f32 %v598, %v614
      %v623 = vperm.slane %v471, 4
      %v624 = vperm.slane %v472, 4
      %v625 = vperm.slane %v473, 4
      %v626 = vperm.slane %v474, 4
      %v627 = vperm.slane %v475, 4
      %v628 = vperm.slane %v476, 4
      %v629 = vperm.slane %v477, 4
      %v630 = vperm.slane %v478, 4
      %v631 = vmul.f32 %v623, %v266
      %v632 = vmul.f32 %v624, %v266
      %v633 = vmul.f32 %v625, %v266
      %v634 = vmul.f32 %v626, %v266
      %v635 = vmul.f32 %v627, %v266
      %v636 = vmul.f32 %v628, %v266
      %v637 = vmul.f32 %v629, %v266
      %v638 = vmul.f32 %v630, %v266
      %v639 = vadd.f32 %v615, %v631
      %v640 = vadd.f32 %v616, %v632
      %v641 = vadd.f32 %v617, %v633
      %v642 = vadd.f32 %v618, %v634
      %v643 = vadd.f32 %v619, %v635
      %v644 = vadd.f32 %v620, %v636
      %v645 = vadd.f32 %v621, %v637
      %v646 = vadd.f32 %v622, %v638
      %v647 = vperm.slane %v471, 5
      %v648 = vperm.slane %v472, 5
      %v649 = vperm.slane %v473, 5
      %v650 = vperm.slane %v474, 5
      %v651 = vperm.slane %v475, 5
      %v652 = vperm.slane %v476, 5
      %v653 = vperm.slane %v477, 5
      %v654 = vperm.slane %v478, 5
      %v655 = vmul.f32 %v647, %v267
      %v656 = vmul.f32 %v648, %v267
      %v657 = vmul.f32 %v649, %v267
      %v658 = vmul.f32 %v650, %v267
      %v659 = vmul.f32 %v651, %v267
      %v660 = vmul.f32 %v652, %v267
      %v661 = vmul.f32 %v653, %v267
      %v662 = vmul.f32 %v654, %v267
      %v663 = vadd.f32 %v639, %v655
      %v664 = vadd.f32 %v640, %v656
      %v665 = vadd.f32 %v641, %v657
      %v666 = vadd.f32 %v642, %v658
      %v667 = vadd.f32 %v643, %v659
      %v668 = vadd.f32 %v644, %v660
      %v669 = vadd.f32 %v645, %v661
      %v670 = vadd.f32 %v646, %v662
      %v671 = vperm.slane %v471, 6
      %v672 = vperm.slane %v472, 6
      %v673 = vperm.slane %v473, 6
      %v674 = vperm.slane %v474, 6
      %v675 = vperm.slane %v475, 6
      %v676 = vperm.slane %v476, 6
      %v677 = vperm.slane %v477, 6
      %v678 = vperm.slane %v478, 6
      %v679 = vmul.f32 %v671, %v268
      %v680 = vmul.f32 %v672, %v268
      %v681 = vmul.f32 %v673, %v268
      %v682 = vmul.f32 %v674, %v268
      %v683 = vmul.f32 %v675, %v268
      %v684 = vmul.f32 %v676, %v268
      %v685 = vmul.f32 %v677, %v268
      %v686 = vmul.f32 %v678, %v268
      %v687 = vadd.f32 %v663, %v679
      %v688 = vadd.f32 %v664, %v680
      %v689 = vadd.f32 %v665, %v681
      %v690 = vadd.f32 %v666, %v682
      %v691 = vadd.f32 %v667, %v683
      %v692 = vadd.f32 %v668, %v684
      %v693 = vadd.f32 %v669, %v685
      %v694 = vadd.f32 %v670, %v686
      %v695 = vperm.slane %v471, 7
      %v696 = vperm.slane %v472, 7
      %v697 = vperm.slane %v473, 7
      %v698 = vperm.slane %v474, 7
      %v699 = vperm.slane %v475, 7
      %v700 = vperm.slane %v476, 7
      %v701 = vperm.slane %v477, 7
      %v702 = vperm.slane %v478, 7
      %v703 = vmul.f32 %v695, %v269
      %v704 = vmul.f32 %v696, %v269
      %v705 = vmul.f32 %v697, %v269
      %v706 = vmul.f32 %v698, %v269
      %v707 = vmul.f32 %v699, %v269
      %v708 = vmul.f32 %v700, %v269
      %v709 = vmul.f32 %v701, %v269
      %v710 = vmul.f32 %v702, %v269
      %v711 = vadd.f32 %v687, %v703
      %v712 = vadd.f32 %v688, %v704
      %v713 = vadd.f32 %v689, %v705
      %v714 = vadd.f32 %v690, %v706
      %v715 = vadd.f32 %v691, %v707
      %v716 = vadd.f32 %v692, %v708
      %v717 = vadd.f32 %v693, %v709
      %v718 = vadd.f32 %v694, %v710
      %v719 = vpack.c.bf16 %v712, %v711
      %v720 = vpack.c.bf16 %v714, %v713
      %v721 = vpack.c.bf16 %v716, %v715
      %v722 = vpack.c.bf16 %v718, %v717
      %v723 = vld [vmem:[%s3 + $0x80] sm:$0xf]
      %v724 = vld [vmem:[%s3 + $0x84] sm:$0xf]
      %v725 = vld [vmem:[%s3 + $0x88] sm:$0xf]
      %v726 = vld [vmem:[%s3 + $0x8c] sm:$0xf]
      %v727 = vld [vmem:[%s3 + $0x90] sm:$0xf]
      %v728 = vld [vmem:[%s3 + $0x94] sm:$0xf]
      %v729 = vld [vmem:[%s3 + $0x98] sm:$0xf]
      %v730 = vld [vmem:[%s3 + $0x9c] sm:$0xf]
      %v731 = vld [vmem:[%s3 + $0xa0] sm:$0xf]
      %v732 = vld [vmem:[%s3 + $0xa4] sm:$0xf]
      %v733 = vld [vmem:[%s3 + $0xa8] sm:$0xf]
      %v734 = vld [vmem:[%s3 + $0xac] sm:$0xf]
      %v735 = vld [vmem:[%s3 + $0xb0] sm:$0xf]
      %v736 = vld [vmem:[%s3 + $0xb4] sm:$0xf]
      %v737 = vld [vmem:[%s3 + $0xb8] sm:$0xf]
      %v738 = vld [vmem:[%s3 + $0xbc] sm:$0xf]
      %v739 = vld [vmem:[%s4 + $0x2] sm:$0x1]
      %v740 = vperm.slane %v739, 0
      %v757 = vunpack.c.l.b16 %v723
      %v758 = vunpack.c.l.b16 %v724
      %v759 = vunpack.c.l.b16 %v725
      %v760 = vunpack.c.l.b16 %v726
      %v761 = vunpack.c.l.b16 %v727
      %v762 = vunpack.c.l.b16 %v728
      %v763 = vunpack.c.l.b16 %v729
      %v764 = vunpack.c.l.b16 %v730
      %v765 = vunpack.c.l.b16 %v731
      %v766 = vunpack.c.l.b16 %v732
      %v767 = vunpack.c.l.b16 %v733
      %v768 = vunpack.c.l.b16 %v734
      %v769 = vunpack.c.l.b16 %v735
      %v770 = vunpack.c.l.b16 %v736
      %v771 = vunpack.c.l.b16 %v737
      %v772 = vunpack.c.l.b16 %v738
      %v773 = vpack.c.b16 %v758, %v757
      %v774 = vpack.c.b16 %v760, %v759
      %v775 = vpack.c.b16 %v762, %v761
      %v776 = vpack.c.b16 %v764, %v763
      %v777 = vpack.c.b16 %v766, %v765
      %v778 = vpack.c.b16 %v768, %v767
      %v779 = vpack.c.b16 %v770, %v769
      %v780 = vpack.c.b16 %v772, %v771
      %789 = vmatpush.bf16.msra.mxu0 %v780
      %790 = vmatpush.bf16.msra.mxu0 %v779
      %791 = vmatpush.bf16.msra.mxu0 %v778
      %792 = vmatpush.bf16.msra.mxu0 %v777
      %793 = vmatpush.bf16.msra.mxu0 %v776
      %794 = vmatpush.bf16.msra.mxu0 %v775
      %795 = vmatpush.bf16.msra.mxu0 %v774
      %796 = vmatpush.bf16.msra.mxu0 %v773
      %797 = vmatmul.bf16.gmra.mxu0 %v719
      %v798 = vpop.f32.mrf.mxu0
      %v799 = vadd.f32 %v740, %v798
      %v800 = vpop.f32.mrf.mxu0
      %v801 = vadd.f32 %v740, %v800
      %802 = vmatmul.bf16.gmra.mxu0 %v720
      %v803 = vpop.f32.mrf.mxu0
      %v804 = vadd.f32 %v740, %v803
      %v805 = vpop.f32.mrf.mxu0
      %v806 = vadd.f32 %v740, %v805
      %807 = vmatmul.bf16.gmra.mxu0 %v721
      %v808 = vpop.f32.mrf.mxu0
      %v809 = vadd.f32 %v740, %v808
      %v810 = vpop.f32.mrf.mxu0
      %v811 = vadd.f32 %v740, %v810
      %812 = vmatmul.bf16.gmra.mxu0 %v722
      %v813 = vpop.f32.mrf.mxu0
      %v814 = vadd.f32 %v740, %v813
      %v815 = vpop.f32.mrf.mxu0
      %v816 = vadd.f32 %v740, %v815
      %817 = vdwg.mxu0
      %v818 = vmax.f32 %v799, 0.0
      %v819 = vmax.f32 %v801, 0.0
      %v820 = vmax.f32 %v804, 0.0
      %v821 = vmax.f32 %v806, 0.0
      %v822 = vmax.f32 %v809, 0.0
      %v823 = vmax.f32 %v811, 0.0
      %v824 = vmax.f32 %v814, 0.0
      %v825 = vmax.f32 %v816, 0.0
      %v826 = vmul.f32 %v818, %v485
      %v827 = vmul.f32 %v819, %v492
      %v828 = vmul.f32 %v820, %v499
      %v829 = vmul.f32 %v821, %v506
      %v830 = vmul.f32 %v822, %v513
      %v831 = vmul.f32 %v823, %v520
      %v832 = vmul.f32 %v824, %v527
      %v833 = vmul.f32 %v825, %v534
      %v834 = vadd.f32 %v471, %v826
      %v835 = vadd.f32 %v472, %v827
      %v836 = vadd.f32 %v473, %v828
      %v837 = vadd.f32 %v474, %v829
      %v838 = vadd.f32 %v475, %v830
      %v839 = vadd.f32 %v476, %v831
      %v840 = vadd.f32 %v477, %v832
      %v841 = vadd.f32 %v478, %v833
      %v842 = vperm.slane %v834, 0
      %v843 = vperm.slane %v835, 0
      %v844 = vperm.slane %v836, 0
      %v845 = vperm.slane %v837, 0
      %v846 = vperm.slane %v838, 0
      %v847 = vperm.slane %v839, 0
      %v848 = vperm.slane %v840, 0
      %v849 = vperm.slane %v841, 0
      %v850 = vmul.f32 %v842, %v262
      %v851 = vmul.f32 %v843, %v262
      %v852 = vmul.f32 %v844, %v262
      %v853 = vmul.f32 %v845, %v262
      %v854 = vmul.f32 %v846, %v262
      %v855 = vmul.f32 %v847, %v262
      %v856 = vmul.f32 %v848, %v262
      %v857 = vmul.f32 %v849, %v262
      %v858 = vperm.slane %v834, 1
      %v859 = vperm.slane %v835, 1
      %v860 = vperm.slane %v836, 1
      %v861 = vperm.slane %v837, 1
      %v862 = vperm.slane %v838, 1
      %v863 = vperm.slane %v839, 1
      %v864 = vperm.slane %v840, 1
      %v865 = vperm.slane %v841, 1
      %v866 = vmul.f32 %v858, %v263
      %v867 = vmul.f32 %v859, %v263
      %v868 = vmul.f32 %v860, %v263
      %v869 = vmul.f32 %v861, %v263
      %v870 = vmul.f32 %v862, %v263
      %v871 = vmul.f32 %v863, %v263
      %v872 = vmul.f32 %v864, %v263
      %v873 = vmul.f32 %v865, %v263
      %v874 = vadd.f32 %v850, %v866
      %v875 = vadd.f32 %v851, %v867
      %v876 = vadd.f32 %v852, %v868
      %v877 = vadd.f32 %v853, %v869
      %v878 = vadd.f32 %v854, %v870
      %v879 = vadd.f32 %v855, %v871
      %v880 = vadd.f32 %v856, %v872
      %v881 = vadd.f32 %v857, %v873
      %v882 = vperm.slane %v834, 2
      %v883 = vperm.slane %v835, 2
      %v884 = vperm.slane %v836, 2
      %v885 = vperm.slane %v837, 2
      %v886 = vperm.slane %v838, 2
      %v887 = vperm.slane %v839, 2
      %v888 = vperm.slane %v840, 2
      %v889 = vperm.slane %v841, 2
      %v890 = vmul.f32 %v882, %v264
      %v891 = vmul.f32 %v883, %v264
      %v892 = vmul.f32 %v884, %v264
      %v893 = vmul.f32 %v885, %v264
      %v894 = vmul.f32 %v886, %v264
      %v895 = vmul.f32 %v887, %v264
      %v896 = vmul.f32 %v888, %v264
      %v897 = vmul.f32 %v889, %v264
      %v898 = vadd.f32 %v874, %v890
      %v899 = vadd.f32 %v875, %v891
      %v900 = vadd.f32 %v876, %v892
      %v901 = vadd.f32 %v877, %v893
      %v902 = vadd.f32 %v878, %v894
      %v903 = vadd.f32 %v879, %v895
      %v904 = vadd.f32 %v880, %v896
      %v905 = vadd.f32 %v881, %v897
      %v906 = vperm.slane %v834, 3
      %v907 = vperm.slane %v835, 3
      %v908 = vperm.slane %v836, 3
      %v909 = vperm.slane %v837, 3
      %v910 = vperm.slane %v838, 3
      %v911 = vperm.slane %v839, 3
      %v912 = vperm.slane %v840, 3
      %v913 = vperm.slane %v841, 3
      %v914 = vmul.f32 %v906, %v265
      %v915 = vmul.f32 %v907, %v265
      %v916 = vmul.f32 %v908, %v265
      %v917 = vmul.f32 %v909, %v265
      %v918 = vmul.f32 %v910, %v265
      %v919 = vmul.f32 %v911, %v265
      %v920 = vmul.f32 %v912, %v265
      %v921 = vmul.f32 %v913, %v265
      %v922 = vadd.f32 %v898, %v914
      %v923 = vadd.f32 %v899, %v915
      %v924 = vadd.f32 %v900, %v916
      %v925 = vadd.f32 %v901, %v917
      %v926 = vadd.f32 %v902, %v918
      %v927 = vadd.f32 %v903, %v919
      %v928 = vadd.f32 %v904, %v920
      %v929 = vadd.f32 %v905, %v921
      %v930 = vperm.slane %v834, 4
      %v931 = vperm.slane %v835, 4
      %v932 = vperm.slane %v836, 4
      %v933 = vperm.slane %v837, 4
      %v934 = vperm.slane %v838, 4
      %v935 = vperm.slane %v839, 4
      %v936 = vperm.slane %v840, 4
      %v937 = vperm.slane %v841, 4
      %v938 = vmul.f32 %v930, %v266
      %v939 = vmul.f32 %v931, %v266
      %v940 = vmul.f32 %v932, %v266
      %v941 = vmul.f32 %v933, %v266
      %v942 = vmul.f32 %v934, %v266
      %v943 = vmul.f32 %v935, %v266
      %v944 = vmul.f32 %v936, %v266
      %v945 = vmul.f32 %v937, %v266
      %v946 = vadd.f32 %v922, %v938
      %v947 = vadd.f32 %v923, %v939
      %v948 = vadd.f32 %v924, %v940
      %v949 = vadd.f32 %v925, %v941
      %v950 = vadd.f32 %v926, %v942
      %v951 = vadd.f32 %v927, %v943
      %v952 = vadd.f32 %v928, %v944
      %v953 = vadd.f32 %v929, %v945
      %v954 = vperm.slane %v834, 5
      %v955 = vperm.slane %v835, 5
      %v956 = vperm.slane %v836, 5
      %v957 = vperm.slane %v837, 5
      %v958 = vperm.slane %v838, 5
      %v959 = vperm.slane %v839, 5
      %v960 = vperm.slane %v840, 5
      %v961 = vperm.slane %v841, 5
      %v962 = vmul.f32 %v954, %v267
      %v963 = vmul.f32 %v955, %v267
      %v964 = vmul.f32 %v956, %v267
      %v965 = vmul.f32 %v957, %v267
      %v966 = vmul.f32 %v958, %v267
      %v967 = vmul.f32 %v959, %v267
      %v968 = vmul.f32 %v960, %v267
      %v969 = vmul.f32 %v961, %v267
      %v970 = vadd.f32 %v946, %v962
      %v971 = vadd.f32 %v947, %v963
      %v972 = vadd.f32 %v948, %v964
      %v973 = vadd.f32 %v949, %v965
      %v974 = vadd.f32 %v950, %v966
      %v975 = vadd.f32 %v951, %v967
      %v976 = vadd.f32 %v952, %v968
      %v977 = vadd.f32 %v953, %v969
      %v978 = vperm.slane %v834, 6
      %v979 = vperm.slane %v835, 6
      %v980 = vperm.slane %v836, 6
      %v981 = vperm.slane %v837, 6
      %v982 = vperm.slane %v838, 6
      %v983 = vperm.slane %v839, 6
      %v984 = vperm.slane %v840, 6
      %v985 = vperm.slane %v841, 6
      %v986 = vmul.f32 %v978, %v268
      %v987 = vmul.f32 %v979, %v268
      %v988 = vmul.f32 %v980, %v268
      %v989 = vmul.f32 %v981, %v268
      %v990 = vmul.f32 %v982, %v268
      %v991 = vmul.f32 %v983, %v268
      %v992 = vmul.f32 %v984, %v268
      %v993 = vmul.f32 %v985, %v268
      %v994 = vadd.f32 %v970, %v986
      %v995 = vadd.f32 %v971, %v987
      %v996 = vadd.f32 %v972, %v988
      %v997 = vadd.f32 %v973, %v989
      %v998 = vadd.f32 %v974, %v990
      %v999 = vadd.f32 %v975, %v991
      %v1000 = vadd.f32 %v976, %v992
      %v1001 = vadd.f32 %v977, %v993
      %v1002 = vperm.slane %v834, 7
      %v1003 = vperm.slane %v835, 7
      %v1004 = vperm.slane %v836, 7
      %v1005 = vperm.slane %v837, 7
      %v1006 = vperm.slane %v838, 7
      %v1007 = vperm.slane %v839, 7
      %v1008 = vperm.slane %v840, 7
      %v1009 = vperm.slane %v841, 7
      %v1010 = vmul.f32 %v1002, %v269
      %v1011 = vmul.f32 %v1003, %v269
      %v1012 = vmul.f32 %v1004, %v269
      %v1013 = vmul.f32 %v1005, %v269
      %v1014 = vmul.f32 %v1006, %v269
      %v1015 = vmul.f32 %v1007, %v269
      %v1016 = vmul.f32 %v1008, %v269
      %v1017 = vmul.f32 %v1009, %v269
      %v1018 = vadd.f32 %v994, %v1010
      %v1019 = vadd.f32 %v995, %v1011
      %v1020 = vadd.f32 %v996, %v1012
      %v1021 = vadd.f32 %v997, %v1013
      %v1022 = vadd.f32 %v998, %v1014
      %v1023 = vadd.f32 %v999, %v1015
      %v1024 = vadd.f32 %v1000, %v1016
      %v1025 = vadd.f32 %v1001, %v1017
      %v1026 = vpack.c.bf16 %v1019, %v1018
      %v1027 = vpack.c.bf16 %v1021, %v1020
      %v1028 = vpack.c.bf16 %v1023, %v1022
      %v1029 = vpack.c.bf16 %v1025, %v1024
      %v1030 = vld [vmem:[%s3 + $0xc0] sm:$0xf]
      %v1031 = vld [vmem:[%s3 + $0xc4] sm:$0xf]
      %v1032 = vld [vmem:[%s3 + $0xc8] sm:$0xf]
      %v1033 = vld [vmem:[%s3 + $0xcc] sm:$0xf]
      %v1034 = vld [vmem:[%s3 + $0xd0] sm:$0xf]
      %v1035 = vld [vmem:[%s3 + $0xd4] sm:$0xf]
      %v1036 = vld [vmem:[%s3 + $0xd8] sm:$0xf]
      %v1037 = vld [vmem:[%s3 + $0xdc] sm:$0xf]
      %v1038 = vld [vmem:[%s3 + $0xe0] sm:$0xf]
      %v1039 = vld [vmem:[%s3 + $0xe4] sm:$0xf]
      %v1040 = vld [vmem:[%s3 + $0xe8] sm:$0xf]
      %v1041 = vld [vmem:[%s3 + $0xec] sm:$0xf]
      %v1042 = vld [vmem:[%s3 + $0xf0] sm:$0xf]
      %v1043 = vld [vmem:[%s3 + $0xf4] sm:$0xf]
      %v1044 = vld [vmem:[%s3 + $0xf8] sm:$0xf]
      %v1045 = vld [vmem:[%s3 + $0xfc] sm:$0xf]
      %v1046 = vld [vmem:[%s4 + $0x3] sm:$0x1]
      %v1047 = vperm.slane %v1046, 0
      %v1064 = vunpack.c.l.b16 %v1030
      %v1065 = vunpack.c.l.b16 %v1031
      %v1066 = vunpack.c.l.b16 %v1032
      %v1067 = vunpack.c.l.b16 %v1033
      %v1068 = vunpack.c.l.b16 %v1034
      %v1069 = vunpack.c.l.b16 %v1035
      %v1070 = vunpack.c.l.b16 %v1036
      %v1071 = vunpack.c.l.b16 %v1037
      %v1072 = vunpack.c.l.b16 %v1038
      %v1073 = vunpack.c.l.b16 %v1039
      %v1074 = vunpack.c.l.b16 %v1040
      %v1075 = vunpack.c.l.b16 %v1041
      %v1076 = vunpack.c.l.b16 %v1042
      %v1077 = vunpack.c.l.b16 %v1043
      %v1078 = vunpack.c.l.b16 %v1044
      %v1079 = vunpack.c.l.b16 %v1045
      %v1080 = vpack.c.b16 %v1065, %v1064
      %v1081 = vpack.c.b16 %v1067, %v1066
      %v1082 = vpack.c.b16 %v1069, %v1068
      %v1083 = vpack.c.b16 %v1071, %v1070
      %v1084 = vpack.c.b16 %v1073, %v1072
      %v1085 = vpack.c.b16 %v1075, %v1074
      %v1086 = vpack.c.b16 %v1077, %v1076
      %v1087 = vpack.c.b16 %v1079, %v1078
      %1096 = vmatpush.bf16.msra.mxu0 %v1087
      %1097 = vmatpush.bf16.msra.mxu0 %v1086
      %1098 = vmatpush.bf16.msra.mxu0 %v1085
      %1099 = vmatpush.bf16.msra.mxu0 %v1084
      %1100 = vmatpush.bf16.msra.mxu0 %v1083
      %1101 = vmatpush.bf16.msra.mxu0 %v1082
      %1102 = vmatpush.bf16.msra.mxu0 %v1081
      %1103 = vmatpush.bf16.msra.mxu0 %v1080
      %1104 = vmatmul.bf16.gmra.mxu0 %v1026
      %v1105 = vpop.f32.mrf.mxu0
      %v1106 = vadd.f32 %v1047, %v1105
      %v1107 = vpop.f32.mrf.mxu0
      %v1108 = vadd.f32 %v1047, %v1107
      %1109 = vmatmul.bf16.gmra.mxu0 %v1027
      %v1110 = vpop.f32.mrf.mxu0
      %v1111 = vadd.f32 %v1047, %v1110
      %v1112 = vpop.f32.mrf.mxu0
      %v1113 = vadd.f32 %v1047, %v1112
      %1114 = vmatmul.bf16.gmra.mxu0 %v1028
      %v1115 = vpop.f32.mrf.mxu0
      %v1116 = vadd.f32 %v1047, %v1115
      %v1117 = vpop.f32.mrf.mxu0
      %v1118 = vadd.f32 %v1047, %v1117
      %1119 = vmatmul.bf16.gmra.mxu0 %v1029
      %v1120 = vpop.f32.mrf.mxu0
      %v1121 = vadd.f32 %v1047, %v1120
      %v1122 = vpop.f32.mrf.mxu0
      %v1123 = vadd.f32 %v1047, %v1122
      %1124 = vdwg.mxu0
      %v1125 = vmax.f32 %v1106, 0.0
      %v1126 = vmax.f32 %v1108, 0.0
      %v1127 = vmax.f32 %v1111, 0.0
      %v1128 = vmax.f32 %v1113, 0.0
      %v1129 = vmax.f32 %v1116, 0.0
      %v1130 = vmax.f32 %v1118, 0.0
      %v1131 = vmax.f32 %v1121, 0.0
      %v1132 = vmax.f32 %v1123, 0.0
      %v1133 = vmul.f32 %v1125, %v485
      %v1134 = vmul.f32 %v1126, %v492
      %v1135 = vmul.f32 %v1127, %v499
      %v1136 = vmul.f32 %v1128, %v506
      %v1137 = vmul.f32 %v1129, %v513
      %v1138 = vmul.f32 %v1130, %v520
      %v1139 = vmul.f32 %v1131, %v527
      %v1140 = vmul.f32 %v1132, %v534
      %v1141 = vadd.f32 %v834, %v1133
      %v1142 = vadd.f32 %v835, %v1134
      %v1143 = vadd.f32 %v836, %v1135
      %v1144 = vadd.f32 %v837, %v1136
      %v1145 = vadd.f32 %v838, %v1137
      %v1146 = vadd.f32 %v839, %v1138
      %v1147 = vadd.f32 %v840, %v1139
      %v1148 = vadd.f32 %v841, %v1140
      %v1149 = vperm.slane %v1141, 0
      %v1150 = vperm.slane %v1142, 0
      %v1151 = vperm.slane %v1143, 0
      %v1152 = vperm.slane %v1144, 0
      %v1153 = vperm.slane %v1145, 0
      %v1154 = vperm.slane %v1146, 0
      %v1155 = vperm.slane %v1147, 0
      %v1156 = vperm.slane %v1148, 0
      %v1157 = vmul.f32 %v1149, %v262
      %v1158 = vmul.f32 %v1150, %v262
      %v1159 = vmul.f32 %v1151, %v262
      %v1160 = vmul.f32 %v1152, %v262
      %v1161 = vmul.f32 %v1153, %v262
      %v1162 = vmul.f32 %v1154, %v262
      %v1163 = vmul.f32 %v1155, %v262
      %v1164 = vmul.f32 %v1156, %v262
      %v1165 = vperm.slane %v1141, 1
      %v1166 = vperm.slane %v1142, 1
      %v1167 = vperm.slane %v1143, 1
      %v1168 = vperm.slane %v1144, 1
      %v1169 = vperm.slane %v1145, 1
      %v1170 = vperm.slane %v1146, 1
      %v1171 = vperm.slane %v1147, 1
      %v1172 = vperm.slane %v1148, 1
      %v1173 = vmul.f32 %v1165, %v263
      %v1174 = vmul.f32 %v1166, %v263
      %v1175 = vmul.f32 %v1167, %v263
      %v1176 = vmul.f32 %v1168, %v263
      %v1177 = vmul.f32 %v1169, %v263
      %v1178 = vmul.f32 %v1170, %v263
      %v1179 = vmul.f32 %v1171, %v263
      %v1180 = vmul.f32 %v1172, %v263
      %v1181 = vadd.f32 %v1157, %v1173
      %v1182 = vadd.f32 %v1158, %v1174
      %v1183 = vadd.f32 %v1159, %v1175
      %v1184 = vadd.f32 %v1160, %v1176
      %v1185 = vadd.f32 %v1161, %v1177
      %v1186 = vadd.f32 %v1162, %v1178
      %v1187 = vadd.f32 %v1163, %v1179
      %v1188 = vadd.f32 %v1164, %v1180
      %v1189 = vperm.slane %v1141, 2
      %v1190 = vperm.slane %v1142, 2
      %v1191 = vperm.slane %v1143, 2
      %v1192 = vperm.slane %v1144, 2
      %v1193 = vperm.slane %v1145, 2
      %v1194 = vperm.slane %v1146, 2
      %v1195 = vperm.slane %v1147, 2
      %v1196 = vperm.slane %v1148, 2
      %v1197 = vmul.f32 %v1189, %v264
      %v1198 = vmul.f32 %v1190, %v264
      %v1199 = vmul.f32 %v1191, %v264
      %v1200 = vmul.f32 %v1192, %v264
      %v1201 = vmul.f32 %v1193, %v264
      %v1202 = vmul.f32 %v1194, %v264
      %v1203 = vmul.f32 %v1195, %v264
      %v1204 = vmul.f32 %v1196, %v264
      %v1205 = vadd.f32 %v1181, %v1197
      %v1206 = vadd.f32 %v1182, %v1198
      %v1207 = vadd.f32 %v1183, %v1199
      %v1208 = vadd.f32 %v1184, %v1200
      %v1209 = vadd.f32 %v1185, %v1201
      %v1210 = vadd.f32 %v1186, %v1202
      %v1211 = vadd.f32 %v1187, %v1203
      %v1212 = vadd.f32 %v1188, %v1204
      %v1213 = vperm.slane %v1141, 3
      %v1214 = vperm.slane %v1142, 3
      %v1215 = vperm.slane %v1143, 3
      %v1216 = vperm.slane %v1144, 3
      %v1217 = vperm.slane %v1145, 3
      %v1218 = vperm.slane %v1146, 3
      %v1219 = vperm.slane %v1147, 3
      %v1220 = vperm.slane %v1148, 3
      %v1221 = vmul.f32 %v1213, %v265
      %v1222 = vmul.f32 %v1214, %v265
      %v1223 = vmul.f32 %v1215, %v265
      %v1224 = vmul.f32 %v1216, %v265
      %v1225 = vmul.f32 %v1217, %v265
      %v1226 = vmul.f32 %v1218, %v265
      %v1227 = vmul.f32 %v1219, %v265
      %v1228 = vmul.f32 %v1220, %v265
      %v1229 = vadd.f32 %v1205, %v1221
      %v1230 = vadd.f32 %v1206, %v1222
      %v1231 = vadd.f32 %v1207, %v1223
      %v1232 = vadd.f32 %v1208, %v1224
      %v1233 = vadd.f32 %v1209, %v1225
      %v1234 = vadd.f32 %v1210, %v1226
      %v1235 = vadd.f32 %v1211, %v1227
      %v1236 = vadd.f32 %v1212, %v1228
      %v1237 = vperm.slane %v1141, 4
      %v1238 = vperm.slane %v1142, 4
      %v1239 = vperm.slane %v1143, 4
      %v1240 = vperm.slane %v1144, 4
      %v1241 = vperm.slane %v1145, 4
      %v1242 = vperm.slane %v1146, 4
      %v1243 = vperm.slane %v1147, 4
      %v1244 = vperm.slane %v1148, 4
      %v1245 = vmul.f32 %v1237, %v266
      %v1246 = vmul.f32 %v1238, %v266
      %v1247 = vmul.f32 %v1239, %v266
      %v1248 = vmul.f32 %v1240, %v266
      %v1249 = vmul.f32 %v1241, %v266
      %v1250 = vmul.f32 %v1242, %v266
      %v1251 = vmul.f32 %v1243, %v266
      %v1252 = vmul.f32 %v1244, %v266
      %v1253 = vadd.f32 %v1229, %v1245
      %v1254 = vadd.f32 %v1230, %v1246
      %v1255 = vadd.f32 %v1231, %v1247
      %v1256 = vadd.f32 %v1232, %v1248
      %v1257 = vadd.f32 %v1233, %v1249
      %v1258 = vadd.f32 %v1234, %v1250
      %v1259 = vadd.f32 %v1235, %v1251
      %v1260 = vadd.f32 %v1236, %v1252
      %v1261 = vperm.slane %v1141, 5
      %v1262 = vperm.slane %v1142, 5
      %v1263 = vperm.slane %v1143, 5
      %v1264 = vperm.slane %v1144, 5
      %v1265 = vperm.slane %v1145, 5
      %v1266 = vperm.slane %v1146, 5
      %v1267 = vperm.slane %v1147, 5
      %v1268 = vperm.slane %v1148, 5
      %v1269 = vmul.f32 %v1261, %v267
      %v1270 = vmul.f32 %v1262, %v267
      %v1271 = vmul.f32 %v1263, %v267
      %v1272 = vmul.f32 %v1264, %v267
      %v1273 = vmul.f32 %v1265, %v267
      %v1274 = vmul.f32 %v1266, %v267
      %v1275 = vmul.f32 %v1267, %v267
      %v1276 = vmul.f32 %v1268, %v267
      %v1277 = vadd.f32 %v1253, %v1269
      %v1278 = vadd.f32 %v1254, %v1270
      %v1279 = vadd.f32 %v1255, %v1271
      %v1280 = vadd.f32 %v1256, %v1272
      %v1281 = vadd.f32 %v1257, %v1273
      %v1282 = vadd.f32 %v1258, %v1274
      %v1283 = vadd.f32 %v1259, %v1275
      %v1284 = vadd.f32 %v1260, %v1276
      %v1285 = vperm.slane %v1141, 6
      %v1286 = vperm.slane %v1142, 6
      %v1287 = vperm.slane %v1143, 6
      %v1288 = vperm.slane %v1144, 6
      %v1289 = vperm.slane %v1145, 6
      %v1290 = vperm.slane %v1146, 6
      %v1291 = vperm.slane %v1147, 6
      %v1292 = vperm.slane %v1148, 6
      %v1293 = vmul.f32 %v1285, %v268
      %v1294 = vmul.f32 %v1286, %v268
      %v1295 = vmul.f32 %v1287, %v268
      %v1296 = vmul.f32 %v1288, %v268
      %v1297 = vmul.f32 %v1289, %v268
      %v1298 = vmul.f32 %v1290, %v268
      %v1299 = vmul.f32 %v1291, %v268
      %v1300 = vmul.f32 %v1292, %v268
      %v1301 = vadd.f32 %v1277, %v1293
      %v1302 = vadd.f32 %v1278, %v1294
      %v1303 = vadd.f32 %v1279, %v1295
      %v1304 = vadd.f32 %v1280, %v1296
      %v1305 = vadd.f32 %v1281, %v1297
      %v1306 = vadd.f32 %v1282, %v1298
      %v1307 = vadd.f32 %v1283, %v1299
      %v1308 = vadd.f32 %v1284, %v1300
      %v1309 = vperm.slane %v1141, 7
      %v1310 = vperm.slane %v1142, 7
      %v1311 = vperm.slane %v1143, 7
      %v1312 = vperm.slane %v1144, 7
      %v1313 = vperm.slane %v1145, 7
      %v1314 = vperm.slane %v1146, 7
      %v1315 = vperm.slane %v1147, 7
      %v1316 = vperm.slane %v1148, 7
      %v1317 = vmul.f32 %v1309, %v269
      %v1318 = vmul.f32 %v1310, %v269
      %v1319 = vmul.f32 %v1311, %v269
      %v1320 = vmul.f32 %v1312, %v269
      %v1321 = vmul.f32 %v1313, %v269
      %v1322 = vmul.f32 %v1314, %v269
      %v1323 = vmul.f32 %v1315, %v269
      %v1324 = vmul.f32 %v1316, %v269
      %v1325 = vadd.f32 %v1301, %v1317
      %v1326 = vadd.f32 %v1302, %v1318
      %v1327 = vadd.f32 %v1303, %v1319
      %v1328 = vadd.f32 %v1304, %v1320
      %v1329 = vadd.f32 %v1305, %v1321
      %v1330 = vadd.f32 %v1306, %v1322
      %v1331 = vadd.f32 %v1307, %v1323
      %v1332 = vadd.f32 %v1308, %v1324
      %v1333 = vpack.c.bf16 %v1326, %v1325
      %v1334 = vpack.c.bf16 %v1328, %v1327
      %v1335 = vpack.c.bf16 %v1330, %v1329
      %v1336 = vpack.c.bf16 %v1332, %v1331
      %v1337 = vld [vmem:[%s3 + $0x100] sm:$0xf]
      %v1338 = vld [vmem:[%s3 + $0x104] sm:$0xf]
      %v1339 = vld [vmem:[%s3 + $0x108] sm:$0xf]
      %v1340 = vld [vmem:[%s3 + $0x10c] sm:$0xf]
      %v1341 = vld [vmem:[%s3 + $0x110] sm:$0xf]
      %v1342 = vld [vmem:[%s3 + $0x114] sm:$0xf]
      %v1343 = vld [vmem:[%s3 + $0x118] sm:$0xf]
      %v1344 = vld [vmem:[%s3 + $0x11c] sm:$0xf]
      %v1345 = vld [vmem:[%s3 + $0x120] sm:$0xf]
      %v1346 = vld [vmem:[%s3 + $0x124] sm:$0xf]
      %v1347 = vld [vmem:[%s3 + $0x128] sm:$0xf]
      %v1348 = vld [vmem:[%s3 + $0x12c] sm:$0xf]
      %v1349 = vld [vmem:[%s3 + $0x130] sm:$0xf]
      %v1350 = vld [vmem:[%s3 + $0x134] sm:$0xf]
      %v1351 = vld [vmem:[%s3 + $0x138] sm:$0xf]
      %v1352 = vld [vmem:[%s3 + $0x13c] sm:$0xf]
      %v1353 = vld [vmem:[%s4 + $0x4] sm:$0x1]
      %v1354 = vperm.slane %v1353, 0
      %v1371 = vunpack.c.l.b16 %v1337
      %v1372 = vunpack.c.l.b16 %v1338
      %v1373 = vunpack.c.l.b16 %v1339
      %v1374 = vunpack.c.l.b16 %v1340
      %v1375 = vunpack.c.l.b16 %v1341
      %v1376 = vunpack.c.l.b16 %v1342
      %v1377 = vunpack.c.l.b16 %v1343
      %v1378 = vunpack.c.l.b16 %v1344
      %v1379 = vunpack.c.l.b16 %v1345
      %v1380 = vunpack.c.l.b16 %v1346
      %v1381 = vunpack.c.l.b16 %v1347
      %v1382 = vunpack.c.l.b16 %v1348
      %v1383 = vunpack.c.l.b16 %v1349
      %v1384 = vunpack.c.l.b16 %v1350
      %v1385 = vunpack.c.l.b16 %v1351
      %v1386 = vunpack.c.l.b16 %v1352
      %v1387 = vpack.c.b16 %v1372, %v1371
      %v1388 = vpack.c.b16 %v1374, %v1373
      %v1389 = vpack.c.b16 %v1376, %v1375
      %v1390 = vpack.c.b16 %v1378, %v1377
      %v1391 = vpack.c.b16 %v1380, %v1379
      %v1392 = vpack.c.b16 %v1382, %v1381
      %v1393 = vpack.c.b16 %v1384, %v1383
      %v1394 = vpack.c.b16 %v1386, %v1385
      %1403 = vmatpush.bf16.msra.mxu0 %v1394
      %1404 = vmatpush.bf16.msra.mxu0 %v1393
      %1405 = vmatpush.bf16.msra.mxu0 %v1392
      %1406 = vmatpush.bf16.msra.mxu0 %v1391
      %1407 = vmatpush.bf16.msra.mxu0 %v1390
      %1408 = vmatpush.bf16.msra.mxu0 %v1389
      %1409 = vmatpush.bf16.msra.mxu0 %v1388
      %1410 = vmatpush.bf16.msra.mxu0 %v1387
      %1411 = vmatmul.bf16.gmra.mxu0 %v1333
      %v1412 = vpop.f32.mrf.mxu0
      %v1413 = vadd.f32 %v1354, %v1412
      %v1414 = vpop.f32.mrf.mxu0
      %v1415 = vadd.f32 %v1354, %v1414
      %1416 = vmatmul.bf16.gmra.mxu0 %v1334
      %v1417 = vpop.f32.mrf.mxu0
      %v1418 = vadd.f32 %v1354, %v1417
      %v1419 = vpop.f32.mrf.mxu0
      %v1420 = vadd.f32 %v1354, %v1419
      %1421 = vmatmul.bf16.gmra.mxu0 %v1335
      %v1422 = vpop.f32.mrf.mxu0
      %v1423 = vadd.f32 %v1354, %v1422
      %v1424 = vpop.f32.mrf.mxu0
      %v1425 = vadd.f32 %v1354, %v1424
      %1426 = vmatmul.bf16.gmra.mxu0 %v1336
      %v1427 = vpop.f32.mrf.mxu0
      %v1428 = vadd.f32 %v1354, %v1427
      %v1429 = vpop.f32.mrf.mxu0
      %v1430 = vadd.f32 %v1354, %v1429
      %1431 = vdwg.mxu0
      %v1432 = vmax.f32 %v1413, 0.0
      %v1433 = vmax.f32 %v1415, 0.0
      %v1434 = vmax.f32 %v1418, 0.0
      %v1435 = vmax.f32 %v1420, 0.0
      %v1436 = vmax.f32 %v1423, 0.0
      %v1437 = vmax.f32 %v1425, 0.0
      %v1438 = vmax.f32 %v1428, 0.0
      %v1439 = vmax.f32 %v1430, 0.0
      %v1440 = vmul.f32 %v1432, %v485
      %v1441 = vmul.f32 %v1433, %v492
      %v1442 = vmul.f32 %v1434, %v499
      %v1443 = vmul.f32 %v1435, %v506
      %v1444 = vmul.f32 %v1436, %v513
      %v1445 = vmul.f32 %v1437, %v520
      %v1446 = vmul.f32 %v1438, %v527
      %v1447 = vmul.f32 %v1439, %v534
      %v1448 = vadd.f32 %v1141, %v1440
      %v1449 = vadd.f32 %v1142, %v1441
      %v1450 = vadd.f32 %v1143, %v1442
      %v1451 = vadd.f32 %v1144, %v1443
      %v1452 = vadd.f32 %v1145, %v1444
      %v1453 = vadd.f32 %v1146, %v1445
      %v1454 = vadd.f32 %v1147, %v1446
      %v1455 = vadd.f32 %v1148, %v1447
      %v1456 = vrot.slane %v1448, 4
      %v1457 = vadd.f32 %v1448, %v1456
      %v1458 = vrot.slane %v1457, 2
      %v1459 = vadd.f32 %v1457, %v1458
      %v1460 = vrot.slane %v1459, 1
      %v1461 = vadd.f32 %v1459, %v1460
      %v1462 = vrot.slane %v1449, 4
      %v1463 = vadd.f32 %v1449, %v1462
      %v1464 = vrot.slane %v1463, 2
      %v1465 = vadd.f32 %v1463, %v1464
      %v1466 = vrot.slane %v1465, 1
      %v1467 = vadd.f32 %v1465, %v1466
      %v1468 = vrot.slane %v1450, 4
      %v1469 = vadd.f32 %v1450, %v1468
      %v1470 = vrot.slane %v1469, 2
      %v1471 = vadd.f32 %v1469, %v1470
      %v1472 = vrot.slane %v1471, 1
      %v1473 = vadd.f32 %v1471, %v1472
      %v1474 = vrot.slane %v1451, 4
      %v1475 = vadd.f32 %v1451, %v1474
      %v1476 = vrot.slane %v1475, 2
      %v1477 = vadd.f32 %v1475, %v1476
      %v1478 = vrot.slane %v1477, 1
      %v1479 = vadd.f32 %v1477, %v1478
      %v1480 = vrot.slane %v1452, 4
      %v1481 = vadd.f32 %v1452, %v1480
      %v1482 = vrot.slane %v1481, 2
      %v1483 = vadd.f32 %v1481, %v1482
      %v1484 = vrot.slane %v1483, 1
      %v1485 = vadd.f32 %v1483, %v1484
      %v1486 = vrot.slane %v1453, 4
      %v1487 = vadd.f32 %v1453, %v1486
      %v1488 = vrot.slane %v1487, 2
      %v1489 = vadd.f32 %v1487, %v1488
      %v1490 = vrot.slane %v1489, 1
      %v1491 = vadd.f32 %v1489, %v1490
      %v1492 = vrot.slane %v1454, 4
      %v1493 = vadd.f32 %v1454, %v1492
      %v1494 = vrot.slane %v1493, 2
      %v1495 = vadd.f32 %v1493, %v1494
      %v1496 = vrot.slane %v1495, 1
      %v1497 = vadd.f32 %v1495, %v1496
      %v1498 = vrot.slane %v1455, 4
      %v1499 = vadd.f32 %v1455, %v1498
      %v1500 = vrot.slane %v1499, 2
      %v1501 = vadd.f32 %v1499, %v1500
      %v1502 = vrot.slane %v1501, 1
      %v1503 = vadd.f32 %v1501, %v1502
      %vm1504 = vcmask 64512
      %v1505 = vsel %vm1504, %v278, 0.0
      %1506 = vadd.xlane.f32.xlu0 %v1505
      %v1507 = vpop.xlane.xlu0 %1506
      %v1508 = vmax.f32 %v1507, 1.0
      %v1510 = vrot.slane %v1508, 1
      %v1511 = vrot.slane %v1508, 2
      %v1512 = vrot.slane %v1508, 3
      %v1513 = vrot.slane %v1508, 4
      %v1514 = vrot.slane %v1508, 5
      %v1515 = vrot.slane %v1508, 6
      %v1516 = vrot.slane %v1508, 7
      %v1525 = vrcp.pop %v1508
      %v1526 = vmul.f32 %v1508, %v1525
      %v1527 = vsub.f32 1.0, %v1526
      %v1528 = vmul.f32 %v1525, %v1527
      %v1529 = vadd.f32 %v1525, %v1528
      %vm1530 = vweird.f32 %v1508
      %vm1531 = vweird.f32 %v1525
      %vm1532 = vmor %vm1530, %vm1531
      %v1533 = vsel %vm1532, %v1525, %v1529
      %v1534 = vand.u32 2147483647, %v1508
      %vm1535 = vcmp.eq.f32.partialorder %v1534, 8.507059e+37
      %v1536 = vand.u32 %v1508, 2147483648
      %v1537 = vor.u32 1.1754944e-38, %v1536
      %v1538 = vsel %vm1535, %v1537, %v1533
      %v1539 = vmul.f32 %v1461, %v1538
      %v1540 = vrcp.pop %v1510
      %v1541 = vmul.f32 %v1510, %v1540
      %v1542 = vsub.f32 1.0, %v1541
      %v1543 = vmul.f32 %v1540, %v1542
      %v1544 = vadd.f32 %v1540, %v1543
      %vm1545 = vweird.f32 %v1510
      %vm1546 = vweird.f32 %v1540
      %vm1547 = vmor %vm1545, %vm1546
      %v1548 = vsel %vm1547, %v1540, %v1544
      %v1549 = vand.u32 2147483647, %v1510
      %vm1550 = vcmp.eq.f32.partialorder %v1549, 8.507059e+37
      %v1551 = vand.u32 %v1510, 2147483648
      %v1552 = vor.u32 1.1754944e-38, %v1551
      %v1553 = vsel %vm1550, %v1552, %v1548
      %v1554 = vmul.f32 %v1467, %v1553
      %v1555 = vrcp.pop %v1511
      %v1556 = vmul.f32 %v1511, %v1555
      %v1557 = vsub.f32 1.0, %v1556
      %v1558 = vmul.f32 %v1555, %v1557
      %v1559 = vadd.f32 %v1555, %v1558
      %vm1560 = vweird.f32 %v1511
      %vm1561 = vweird.f32 %v1555
      %vm1562 = vmor %vm1560, %vm1561
      %v1563 = vsel %vm1562, %v1555, %v1559
      %v1564 = vand.u32 2147483647, %v1511
      %vm1565 = vcmp.eq.f32.partialorder %v1564, 8.507059e+37
      %v1566 = vand.u32 %v1511, 2147483648
      %v1567 = vor.u32 1.1754944e-38, %v1566
      %v1568 = vsel %vm1565, %v1567, %v1563
      %v1569 = vmul.f32 %v1473, %v1568
      %v1570 = vrcp.pop %v1512
      %v1571 = vmul.f32 %v1512, %v1570
      %v1572 = vsub.f32 1.0, %v1571
      %v1573 = vmul.f32 %v1570, %v1572
      %v1574 = vadd.f32 %v1570, %v1573
      %vm1575 = vweird.f32 %v1512
      %vm1576 = vweird.f32 %v1570
      %vm1577 = vmor %vm1575, %vm1576
      %v1578 = vsel %vm1577, %v1570, %v1574
      %v1579 = vand.u32 2147483647, %v1512
      %vm1580 = vcmp.eq.f32.partialorder %v1579, 8.507059e+37
      %v1581 = vand.u32 %v1512, 2147483648
      %v1582 = vor.u32 1.1754944e-38, %v1581
      %v1583 = vsel %vm1580, %v1582, %v1578
      %v1584 = vmul.f32 %v1479, %v1583
      %v1585 = vrcp.pop %v1513
      %v1586 = vmul.f32 %v1513, %v1585
      %v1587 = vsub.f32 1.0, %v1586
      %v1588 = vmul.f32 %v1585, %v1587
      %v1589 = vadd.f32 %v1585, %v1588
      %vm1590 = vweird.f32 %v1513
      %vm1591 = vweird.f32 %v1585
      %vm1592 = vmor %vm1590, %vm1591
      %v1593 = vsel %vm1592, %v1585, %v1589
      %v1594 = vand.u32 2147483647, %v1513
      %vm1595 = vcmp.eq.f32.partialorder %v1594, 8.507059e+37
      %v1596 = vand.u32 %v1513, 2147483648
      %v1597 = vor.u32 1.1754944e-38, %v1596
      %v1598 = vsel %vm1595, %v1597, %v1593
      %v1599 = vmul.f32 %v1485, %v1598
      %v1600 = vrcp.pop %v1514
      %v1601 = vmul.f32 %v1514, %v1600
      %v1602 = vsub.f32 1.0, %v1601
      %v1603 = vmul.f32 %v1600, %v1602
      %v1604 = vadd.f32 %v1600, %v1603
      %vm1605 = vweird.f32 %v1514
      %vm1606 = vweird.f32 %v1600
      %vm1607 = vmor %vm1605, %vm1606
      %v1608 = vsel %vm1607, %v1600, %v1604
      %v1609 = vand.u32 2147483647, %v1514
      %vm1610 = vcmp.eq.f32.partialorder %v1609, 8.507059e+37
      %v1611 = vand.u32 %v1514, 2147483648
      %v1612 = vor.u32 1.1754944e-38, %v1611
      %v1613 = vsel %vm1610, %v1612, %v1608
      %v1614 = vmul.f32 %v1491, %v1613
      %v1615 = vrcp.pop %v1515
      %v1616 = vmul.f32 %v1515, %v1615
      %v1617 = vsub.f32 1.0, %v1616
      %v1618 = vmul.f32 %v1615, %v1617
      %v1619 = vadd.f32 %v1615, %v1618
      %vm1620 = vweird.f32 %v1515
      %vm1621 = vweird.f32 %v1615
      %vm1622 = vmor %vm1620, %vm1621
      %v1623 = vsel %vm1622, %v1615, %v1619
      %v1624 = vand.u32 2147483647, %v1515
      %vm1625 = vcmp.eq.f32.partialorder %v1624, 8.507059e+37
      %v1626 = vand.u32 %v1515, 2147483648
      %v1627 = vor.u32 1.1754944e-38, %v1626
      %v1628 = vsel %vm1625, %v1627, %v1623
      %v1629 = vmul.f32 %v1497, %v1628
      %v1630 = vrcp.pop %v1516
      %v1631 = vmul.f32 %v1516, %v1630
      %v1632 = vsub.f32 1.0, %v1631
      %v1633 = vmul.f32 %v1630, %v1632
      %v1634 = vadd.f32 %v1630, %v1633
      %vm1635 = vweird.f32 %v1516
      %vm1636 = vweird.f32 %v1630
      %vm1637 = vmor %vm1635, %vm1636
      %v1638 = vsel %vm1637, %v1630, %v1634
      %v1639 = vand.u32 2147483647, %v1516
      %vm1640 = vcmp.eq.f32.partialorder %v1639, 8.507059e+37
      %v1641 = vand.u32 %v1516, 2147483648
      %v1642 = vor.u32 1.1754944e-38, %v1641
      %v1643 = vsel %vm1640, %v1642, %v1638
      %v1644 = vmul.f32 %v1503, %v1643
      %v1645 = vpack.c.bf16 %v1539, %v1539
      %v1646 = vpack.c.bf16 %v1554, %v1554
      %v1647 = vpack.c.bf16 %v1569, %v1569
      %v1648 = vpack.c.bf16 %v1584, %v1584
      %v1649 = vpack.c.bf16 %v1599, %v1599
      %v1650 = vpack.c.bf16 %v1614, %v1614
      %v1651 = vpack.c.bf16 %v1629, %v1629
      %v1652 = vpack.c.bf16 %v1644, %v1644
      %v1653 = vld [vmem:[%s3 + $0x140] sm:$0xf]
      %v1654 = vld [vmem:[%s3 + $0x144] sm:$0xf]
      %v1655 = vld [vmem:[%s3 + $0x148] sm:$0xf]
      %v1656 = vld [vmem:[%s3 + $0x14c] sm:$0xf]
      %v1657 = vld [vmem:[%s3 + $0x150] sm:$0xf]
      %v1658 = vld [vmem:[%s3 + $0x154] sm:$0xf]
      %v1659 = vld [vmem:[%s3 + $0x158] sm:$0xf]
      %v1660 = vld [vmem:[%s3 + $0x15c] sm:$0xf]
      %v1661 = vld [vmem:[%s3 + $0x160] sm:$0xf]
      %v1662 = vld [vmem:[%s3 + $0x164] sm:$0xf]
      %v1663 = vld [vmem:[%s3 + $0x168] sm:$0xf]
      %v1664 = vld [vmem:[%s3 + $0x16c] sm:$0xf]
      %v1665 = vld [vmem:[%s3 + $0x170] sm:$0xf]
      %v1666 = vld [vmem:[%s3 + $0x174] sm:$0xf]
      %v1667 = vld [vmem:[%s3 + $0x178] sm:$0xf]
      %v1668 = vld [vmem:[%s3 + $0x17c] sm:$0xf]
      %v1669 = vld [vmem:[%s4 + $0x5] sm:$0x1]
      %v1670 = vperm.slane %v1669, 0
      %v1679 = vunpack.c.l.b16 %v1645
      %v1680 = vunpack.c.l.b16 %v1646
      %v1681 = vunpack.c.l.b16 %v1647
      %v1682 = vunpack.c.l.b16 %v1648
      %v1683 = vunpack.c.l.b16 %v1649
      %v1684 = vunpack.c.l.b16 %v1650
      %v1685 = vunpack.c.l.b16 %v1651
      %v1686 = vunpack.c.l.b16 %v1652
      %v1687 = vrot.slane %v1680, 7
      %vm1688 = vcmask 1041409
      %v1689 = vsel %vm1688, %v1687, %v1679
      %v1690 = vrot.slane %v1681, 6
      %vm1691 = vcmask 1042434
      %v1692 = vsel %vm1691, %v1690, %v1689
      %v1693 = vrot.slane %v1682, 5
      %vm1694 = vcmask 1043459
      %v1695 = vsel %vm1694, %v1693, %v1692
      %v1696 = vrot.slane %v1683, 4
      %vm1697 = vcmask 1044484
      %v1698 = vsel %vm1697, %v1696, %v1695
      %v1699 = vrot.slane %v1684, 3
      %vm1700 = vcmask 1045509
      %v1701 = vsel %vm1700, %v1699, %v1698
      %v1702 = vrot.slane %v1685, 2
      %vm1703 = vcmask 1046534
      %v1704 = vsel %vm1703, %v1702, %v1701
      %v1705 = vrot.slane %v1686, 1
      %vm1706 = vcmask 1047559
      %v1707 = vsel %vm1706, %v1705, %v1704
      %v1708 = vpack.c.b16 %v1707, %v1707
      %v1726 = vunpack.c.l.b16 %v1653
      %v1727 = vunpack.c.l.b16 %v1654
      %v1728 = vunpack.c.l.b16 %v1655
      %v1729 = vunpack.c.l.b16 %v1656
      %v1730 = vunpack.c.l.b16 %v1657
      %v1731 = vunpack.c.l.b16 %v1658
      %v1732 = vunpack.c.l.b16 %v1659
      %v1733 = vunpack.c.l.b16 %v1660
      %v1734 = vunpack.c.l.b16 %v1661
      %v1735 = vunpack.c.l.b16 %v1662
      %v1736 = vunpack.c.l.b16 %v1663
      %v1737 = vunpack.c.l.b16 %v1664
      %v1738 = vunpack.c.l.b16 %v1665
      %v1739 = vunpack.c.l.b16 %v1666
      %v1740 = vunpack.c.l.b16 %v1667
      %v1741 = vunpack.c.l.b16 %v1668
      %v1742 = vpack.c.b16 %v1727, %v1726
      %v1743 = vpack.c.b16 %v1729, %v1728
      %v1744 = vpack.c.b16 %v1731, %v1730
      %v1745 = vpack.c.b16 %v1733, %v1732
      %v1746 = vpack.c.b16 %v1735, %v1734
      %v1747 = vpack.c.b16 %v1737, %v1736
      %v1748 = vpack.c.b16 %v1739, %v1738
      %v1749 = vpack.c.b16 %v1741, %v1740
      %1758 = vmatpush.bf16.msra.mxu0 %v1749
      %1759 = vmatpush.bf16.msra.mxu0 %v1748
      %1760 = vmatpush.bf16.msra.mxu0 %v1747
      %1761 = vmatpush.bf16.msra.mxu0 %v1746
      %1762 = vmatpush.bf16.msra.mxu0 %v1745
      %1763 = vmatpush.bf16.msra.mxu0 %v1744
      %1764 = vmatpush.bf16.msra.mxu0 %v1743
      %1765 = vmatpush.bf16.msra.mxu0 %v1742
      %1766 = vmatmul.bf16.gmra.mxu0 %v1708
      %v1767 = vpop.f32.mrf.mxu0
      %v1768 = vadd.f32 %v1670, %v1767
      %v1769 = vpop.f32.mrf.mxu0
      %1770 = vdwg.mxu0
      %v1771 = vmax.f32 %v1768, 0.0
      %v1772 = vpack.c.bf16 %v279, %v279
      %v1773 = vpack.c.bf16 %v1771, %v1771
      %v1775 = vsel %vm1504, %v1772, 0
      %vm1777 = vcmask 1043456
      %v1779 = vsel %vm1777, %v1773, 0
      %1781 = vmatpush.bf16.msra.mxu0 0
      %1782 = vmatpush.bf16.msra.mxu0 0
      %1783 = vmatpush.bf16.msra.mxu0 0
      %1784 = vmatpush.bf16.msra.mxu0 0
      %1785 = vmatpush.bf16.msra.mxu0 0
      %1786 = vmatpush.bf16.msra.mxu0 0
      %1787 = vmatpush.bf16.msra.mxu0 0
      %1788 = vmatpush.bf16.msra.mxu0 %v1779
      %1789 = vmatmul.bf16.gmra.mxu0 %v1775
      %v1790 = vpop.f32.mrf.mxu0
      %v1791 = vadd.f32 0.0, %v1790
      %v1792 = vpop.f32.mrf.mxu0
      %1793 = vdwg.mxu0
      %v1794 = vpack.c.bf16 %v1791, %v1791
      %v1795 = vld [vmem:[%s3 + $0x180] sm:$0xf]
      %v1796 = vld [vmem:[%s3 + $0x184] sm:$0xf]
      %v1797 = vld [vmem:[%s3 + $0x188] sm:$0xf]
      %v1798 = vld [vmem:[%s3 + $0x18c] sm:$0xf]
      %v1799 = vld [vmem:[%s3 + $0x190] sm:$0xf]
      %v1800 = vld [vmem:[%s3 + $0x194] sm:$0xf]
      %v1801 = vld [vmem:[%s3 + $0x198] sm:$0xf]
      %v1802 = vld [vmem:[%s3 + $0x19c] sm:$0xf]
      %v1803 = vld [vmem:[%s3 + $0x1a0] sm:$0xf]
      %v1804 = vld [vmem:[%s3 + $0x1a4] sm:$0xf]
      %v1805 = vld [vmem:[%s3 + $0x1a8] sm:$0xf]
      %v1806 = vld [vmem:[%s3 + $0x1ac] sm:$0xf]
      %v1807 = vld [vmem:[%s3 + $0x1b0] sm:$0xf]
      %v1808 = vld [vmem:[%s3 + $0x1b4] sm:$0xf]
      %v1809 = vld [vmem:[%s3 + $0x1b8] sm:$0xf]
      %v1810 = vld [vmem:[%s3 + $0x1bc] sm:$0xf]
      %v1811 = vld [vmem:[%s4 + $0x6] sm:$0x1]
      %v1812 = vperm.slane %v1811, 0
      %v1829 = vunpack.c.l.b16 %v1795
      %v1830 = vunpack.c.l.b16 %v1796
      %v1831 = vunpack.c.l.b16 %v1797
      %v1832 = vunpack.c.l.b16 %v1798
      %v1833 = vunpack.c.l.b16 %v1799
      %v1834 = vunpack.c.l.b16 %v1800
      %v1835 = vunpack.c.l.b16 %v1801
      %v1836 = vunpack.c.l.b16 %v1802
      %v1837 = vunpack.c.l.b16 %v1803
      %v1838 = vunpack.c.l.b16 %v1804
      %v1839 = vunpack.c.l.b16 %v1805
      %v1840 = vunpack.c.l.b16 %v1806
      %v1841 = vunpack.c.l.b16 %v1807
      %v1842 = vunpack.c.l.b16 %v1808
      %v1843 = vunpack.c.l.b16 %v1809
      %v1844 = vunpack.c.l.b16 %v1810
      %v1845 = vpack.c.b16 %v1830, %v1829
      %v1846 = vpack.c.b16 %v1832, %v1831
      %v1847 = vpack.c.b16 %v1834, %v1833
      %v1848 = vpack.c.b16 %v1836, %v1835
      %v1849 = vpack.c.b16 %v1838, %v1837
      %v1850 = vpack.c.b16 %v1840, %v1839
      %v1851 = vpack.c.b16 %v1842, %v1841
      %v1852 = vpack.c.b16 %v1844, %v1843
      %1861 = vmatpush.bf16.msra.mxu0 %v1852
      %1862 = vmatpush.bf16.msra.mxu0 %v1851
      %1863 = vmatpush.bf16.msra.mxu0 %v1850
      %1864 = vmatpush.bf16.msra.mxu0 %v1849
      %1865 = vmatpush.bf16.msra.mxu0 %v1848
      %1866 = vmatpush.bf16.msra.mxu0 %v1847
      %1867 = vmatpush.bf16.msra.mxu0 %v1846
      %1868 = vmatpush.bf16.msra.mxu0 %v1845
      %1869 = vmatmul.bf16.gmra.mxu0 %v1794
      %v1870 = vpop.f32.mrf.mxu0
      %v1871 = vadd.f32 %v1812, %v1870
      %v1872 = vpop.f32.mrf.mxu0
      %1873 = vdwg.mxu0
      %v1874 = vmax.f32 %v1871, 0.0
      %v1875 = vpack.c.bf16 %v1874, %v1874
      %v1876 = vld [vmem:[%s3 + $0x1c0] sm:$0xf]
      %v1877 = vld [vmem:[%s3 + $0x1c4] sm:$0xf]
      %v1878 = vld [vmem:[%s3 + $0x1c8] sm:$0xf]
      %v1879 = vld [vmem:[%s3 + $0x1cc] sm:$0xf]
      %v1880 = vld [vmem:[%s3 + $0x1d0] sm:$0xf]
      %v1881 = vld [vmem:[%s3 + $0x1d4] sm:$0xf]
      %v1882 = vld [vmem:[%s3 + $0x1d8] sm:$0xf]
      %v1883 = vld [vmem:[%s3 + $0x1dc] sm:$0xf]
      %v1884 = vld [vmem:[%s3 + $0x1e0] sm:$0xf]
      %v1885 = vld [vmem:[%s3 + $0x1e4] sm:$0xf]
      %v1886 = vld [vmem:[%s3 + $0x1e8] sm:$0xf]
      %v1887 = vld [vmem:[%s3 + $0x1ec] sm:$0xf]
      %v1888 = vld [vmem:[%s3 + $0x1f0] sm:$0xf]
      %v1889 = vld [vmem:[%s3 + $0x1f4] sm:$0xf]
      %v1890 = vld [vmem:[%s3 + $0x1f8] sm:$0xf]
      %v1891 = vld [vmem:[%s3 + $0x1fc] sm:$0xf]
      %v1892 = vld [vmem:[%s4 + $0x7] sm:$0x1]
      %v1893 = vperm.slane %v1892, 0
      %v1910 = vunpack.c.l.b16 %v1876
      %v1911 = vunpack.c.l.b16 %v1877
      %v1912 = vunpack.c.l.b16 %v1878
      %v1913 = vunpack.c.l.b16 %v1879
      %v1914 = vunpack.c.l.b16 %v1880
      %v1915 = vunpack.c.l.b16 %v1881
      %v1916 = vunpack.c.l.b16 %v1882
      %v1917 = vunpack.c.l.b16 %v1883
      %v1918 = vunpack.c.l.b16 %v1884
      %v1919 = vunpack.c.l.b16 %v1885
      %v1920 = vunpack.c.l.b16 %v1886
      %v1921 = vunpack.c.l.b16 %v1887
      %v1922 = vunpack.c.l.b16 %v1888
      %v1923 = vunpack.c.l.b16 %v1889
      %v1924 = vunpack.c.l.b16 %v1890
      %v1925 = vunpack.c.l.b16 %v1891
      %v1926 = vpack.c.b16 %v1911, %v1910
      %v1927 = vpack.c.b16 %v1913, %v1912
      %v1928 = vpack.c.b16 %v1915, %v1914
      %v1929 = vpack.c.b16 %v1917, %v1916
      %v1930 = vpack.c.b16 %v1919, %v1918
      %v1931 = vpack.c.b16 %v1921, %v1920
      %v1932 = vpack.c.b16 %v1923, %v1922
      %v1933 = vpack.c.b16 %v1925, %v1924
      %1942 = vmatpush.bf16.msra.mxu0 %v1933
      %1943 = vmatpush.bf16.msra.mxu0 %v1932
      %1944 = vmatpush.bf16.msra.mxu0 %v1931
      %1945 = vmatpush.bf16.msra.mxu0 %v1930
      %1946 = vmatpush.bf16.msra.mxu0 %v1929
      %1947 = vmatpush.bf16.msra.mxu0 %v1928
      %1948 = vmatpush.bf16.msra.mxu0 %v1927
      %1949 = vmatpush.bf16.msra.mxu0 %v1926
      %1950 = vmatmul.bf16.gmra.mxu0 %v1875
      %v1951 = vpop.f32.mrf.mxu0
      %v1952 = vadd.f32 %v1893, %v1951
      %v1953 = vpop.f32.mrf.mxu0
      %1954 = vdwg.mxu0
      %1955 = vst [vmem:[%s259] sm:$0xff] %v1952
      %p1956 = scmp.lt.s32.totalorder %s16, 7
      %s1957 = scalar_select %p1956, %s16, 7
      %s1958 = smul.addr %s1957, 8
      %s1959 = scalar_lea.vmem %s5, %s1958
      // Predicated region
      $region41: #{sp_model_forward.1} parent=39 // pred_check
        %p1960 = pneg %p154
      $region42: #{sp_model_forward.1} parent=39 // pred_check_branch
        %1962 = sbr.rel (%p1960) target = $region44
      $region43: #{sp_model_forward.1} parent=39 // pred_region
        _
      $region44: #{sp_model_forward.1} parent=39 // pred_fallthru
        _
    $region40: #{sp_model_forward.1} parent=5 // pred_fallthru
      _
    %p1963 = scmp.le.s32.totalorder 2, %s11
    // Predicated region
    $region45: #{sp_model_forward.1} parent=5 // pred_check
      %p1964 = pneg %p1963
    $region46: #{sp_model_forward.1} parent=5 // pred_check_branch
      %1966 = sbr.rel (%p1964) target = $region48
    $region47: #{sp_model_forward.1} parent=5 // pred_region
      %s1967 = ssub.s32 %s11, 2
      // Predicated region
      $region49: #{sp_model_forward.1} parent=47 // pred_check
        %p1968 = pneg %p160
      $region50: #{sp_model_forward.1} parent=47 // pred_check_branch
        %1970 = sbr.rel (%p1968) target = $region52
      $region51: #{sp_model_forward.1} parent=47 // pred_region
        %p1971 = scmp.lt.s32.totalorder %s17, 7
        %s1972 = scalar_select %p1971, %s17, 7
        %s1973 = smul.addr %s1972, 8
        %s1974 = scalar_lea.vmem %s5, %s1973
      $region52: #{sp_model_forward.1} parent=47 // pred_fallthru
        _
    $region48: #{sp_model_forward.1} parent=5 // pred_fallthru
      _
  $region6: #{sp_model_forward.1} parent=0 // loop_footer
    %s15 = sadd.s32 1, %s11
  $region7: #{sp_model_forward.1} parent=0 // loop_footer_branch
    %10 = sbr.rel target = $region3
  $region8: #{sp_model_forward.1} parent=0 // loop_exit
    _

</llo_original>
